<compile_context>
chip_gen: v7x
topology: tpu7x:2x2x1
jax: 0.10.0
libtpu: 0.0.40
codegen_flags: <defaults>
</compile_context>

<pallas_src>
import math
import functools

import jax
import jax.numpy as jnp
from jax import lax
from jax.experimental import pallas as pl
from jax.experimental.pallas import tpu as pltpu


# ----------------------------------------------------------------------------
# Fused kernel: QKV projection + multi-head attention + output projection,
# one batch element per grid step.
# ----------------------------------------------------------------------------
def _fused_mvca_kernel(x_ref, xl_ref, xr_ref, wq_ref, wkv_ref, wo_ref, bo_ref,
                       o_ref, *, heads, dim_head):
    inner = heads * dim_head

    x = x_ref[0]                                               # (Nq, Dq)
    # torch.cat([xl, xr], dim=1): concat along the sequence (sublane) axis.
    ctx = jnp.concatenate([xl_ref[0], xr_ref[0]], axis=0)      # (Nk, Dq)

    # Projections.  wq already carries the 1/sqrt(dim_head) softmax scale;
    # wkv packs [W_k^T | W_v^T] so k and v come from a single MXU pass.
    q = jnp.dot(x, wq_ref[...], preferred_element_type=jnp.float32)      # (Nq, inner)
    kv = jnp.dot(ctx, wkv_ref[...], preferred_element_type=jnp.float32)  # (Nk, 2*inner)
    k = kv[:, :inner]
    v = kv[:, inner:]

    nq = x.shape[0]
    dq = o_ref.shape[-1]
    # Start the accumulator at the output bias (saves one VPU add at the end).
    out = jnp.broadcast_to(bo_ref[...], (nq, dq)).astype(jnp.float32)

    # Static per-head loop; head split/merge is pure static lane slicing (no
    # data movement outside the kernel).  The head merge + to_out projection
    # is folded into a sum of per-head partial matmuls against W_out^T
    # row-blocks, so no activation concat is required.
    for h in range(heads):
        lo = h * dim_head
        hi = lo + dim_head
        qh = q[:, lo:hi]                                       # (Nq, dh)
        kh = k[:, lo:hi]                                       # (Nk, dh)
        vh = v[:, lo:hi]                                       # (Nk, dh)

        # scores = qh @ kh^T without materializing kh.T (contract last dims).
        s = lax.dot_general(qh, kh, (((1,), (1,)), ((), ())),
                            preferred_element_type=jnp.float32)  # (Nq, Nk)
        m = jnp.max(s, axis=-1, keepdims=True)                   # XLU reduce
        p = jnp.exp(s - m)                                       # EUP
        l = jnp.sum(p, axis=-1, keepdims=True)
        oh = jnp.dot(p, vh, preferred_element_type=jnp.float32)  # (Nq, dh)
        oh = oh * pl.reciprocal(l, approx=False)                 # softmax normalize

        out = out + jnp.dot(oh, wo_ref[lo:hi, :],
                            preferred_element_type=jnp.float32)  # (Nq, Dq)

    o_ref[0] = out.astype(o_ref.dtype)


def multi_view_cross_attention(x, xl, xr, params, heads, dim_head):
    """Fused forward of MultiViewCrossAttention.

    x:  (B, Nq, query_dim)      xl, xr: (B, Nv, query_dim)
    params use the PyTorch nn.Linear layout (out_features, in_features).
    """
    B, Nq, Dq = x.shape
    Nl = xl.shape[1]
    Nr = xr.shape[1]
    inner = heads * dim_head
    scale = 1.0 / math.sqrt(dim_head)

    # Trace-time weight prep (free): transpose to (Din, Dout), fold the softmax
    # scale into W_q, fuse W_k / W_v into one packed weight.
    wq_t = (params["wq"].T * scale).astype(x.dtype)                          # (Dq, inner)
    wkv_t = jnp.concatenate([params["wk"].T, params["wv"].T], axis=1).astype(x.dtype)  # (Dq, 2*inner)
    wo_t = params["wo"].T.astype(x.dtype)                                    # (inner, Dq)
    bo = params["bo"].reshape(1, Dq).astype(x.dtype)                         # (1, Dq)

    kernel = functools.partial(_fused_mvca_kernel, heads=heads, dim_head=dim_head)

    return pl.pallas_call(
        kernel,
        out_shape=jax.ShapeDtypeStruct((B, Nq, Dq), x.dtype),
        grid=(B,),
        in_specs=[
            pl.BlockSpec((1, Nq, Dq), lambda i: (i, 0, 0)),
            pl.BlockSpec((1, Nl, Dq), lambda i: (i, 0, 0)),
            pl.BlockSpec((1, Nr, Dq), lambda i: (i, 0, 0)),
            pl.BlockSpec((Dq, inner), lambda i: (0, 0)),
            pl.BlockSpec((Dq, 2 * inner), lambda i: (0, 0)),
            pl.BlockSpec((inner, Dq), lambda i: (0, 0)),
            pl.BlockSpec((1, Dq), lambda i: (0, 0)),
        ],
        out_specs=pl.BlockSpec((1, Nq, Dq), lambda i: (i, 0, 0)),
        compiler_params=pltpu.CompilerParams(
            dimension_semantics=("parallel",)),
    )(x, xl, xr, wq_t, wkv_t, wo_t, bo)


# ----------------------------------------------------------------------------
# Pure-JAX reference matching the PyTorch forward
# ----------------------------------------------------------------------------
def reference_forward(x, xl, xr, p, heads, dim_head):
    B, Nq, _ = x.shape
    q = x @ p["wq"].T
    ctx = jnp.concatenate([xl, xr], axis=1)
    k = ctx @ p["wk"].T
    v = ctx @ p["wv"].T

    def sh(t):
        return t.reshape(t.shape[0], t.shape[1], heads, dim_head).transpose(0, 2, 1, 3)

    qh, kh, vh = sh(q), sh(k), sh(v)
    s = jnp.einsum("bhqd,bhkd->bhqk", qh, kh) / math.sqrt(dim_head)
    a = jax.nn.softmax(s, axis=-1)
    o = jnp.einsum("bhqk,bhkd->bhqd", a, vh)
    o = o.transpose(0, 2, 1, 3).reshape(B, Nq, heads * dim_head)
    return o @ p["wo"].T + p["bo"]


# ----------------------------------------------------------------------------
# Main
# ----------------------------------------------------------------------------
if __name__ == "__main__":
    B = 2
    Nq = 16          # query sequence length
    Nv = 8           # xl / xr sequence length each -> context length 16
    query_dim = 32
    heads = 4
    dim_head = 8
    inner_dim = heads * dim_head

    key = jax.random.PRNGKey(0)
    kx, kl, kr, kq, kk, kv, ko, kb = jax.random.split(key, 8)

    x = jax.random.normal(kx, (B, Nq, query_dim), jnp.float32)
    xl = jax.random.normal(kl, (B, Nv, query_dim), jnp.float32)
    xr = jax.random.normal(kr, (B, Nv, query_dim), jnp.float32)

    # Parameters (PyTorch nn.Linear layout: weight is (out_features, in_features)).
    # NOTE: the original module zero-inits `to_out` via zero_module(); we use a
    # small random init here so the end-to-end kernel check is non-trivial.
    scale_w = 0.05
    params = {
        "wq": scale_w * jax.random.normal(kq, (inner_dim, query_dim), jnp.float32),
        "wk": scale_w * jax.random.normal(kk, (inner_dim, query_dim), jnp.float32),
        "wv": scale_w * jax.random.normal(kv, (inner_dim, query_dim), jnp.float32),
        "wo": scale_w * jax.random.normal(ko, (query_dim, inner_dim), jnp.float32),
        "bo": scale_w * jax.random.normal(kb, (query_dim,), jnp.float32),
    }

    out = multi_view_cross_attention(x, xl, xr, params, heads, dim_head)
    out = jax.block_until_ready(out)

    ref = reference_forward(x, xl, xr, params, heads, dim_head)
    assert out.shape == (B, Nq, query_dim), out.shape
    assert jnp.allclose(out, ref, atol=1e-5, rtol=1e-5), float(jnp.abs(out - ref).max())

    print("KERNEL_OK")
</pallas_src>

<mosaic_0001>
module attributes {stable_mosaic.version = 11 : i64} {
  func.func @_fused_mvca_kernel(%arg0: i32, %arg1: memref<1x16x32xf32, #tpu.memory_space<vmem>>, %arg2: memref<1x8x32xf32, #tpu.memory_space<vmem>>, %arg3: memref<1x8x32xf32, #tpu.memory_space<vmem>>, %arg4: memref<32x32xf32, #tpu.memory_space<vmem>>, %arg5: memref<32x64xf32, #tpu.memory_space<vmem>>, %arg6: memref<32x32xf32, #tpu.memory_space<vmem>>, %arg7: memref<1x32xf32, #tpu.memory_space<vmem>>, %arg8: memref<1x16x32xf32, #tpu.memory_space<vmem>>) attributes {dimension_semantics = [#tpu.dimension_semantics<parallel>], iteration_bounds = array<i64: 2>, scalar_prefetch = 0 : i64, scratch_operands = 0 : i64, tpu.core_type = #tpu.core_type<tc>, window_params = [{transform_indices = @transform_0, window_bounds = array<i64: 1, 16, 32>}, {transform_indices = @transform_1, window_bounds = array<i64: 1, 8, 32>}, {transform_indices = @transform_2, window_bounds = array<i64: 1, 8, 32>}, {pipeline_mode = #tpu.pipeline_mode<synchronous>, transform_indices = @transform_3, window_bounds = array<i64: 32, 32>}, {pipeline_mode = #tpu.pipeline_mode<synchronous>, transform_indices = @transform_4, window_bounds = array<i64: 32, 64>}, {pipeline_mode = #tpu.pipeline_mode<synchronous>, transform_indices = @transform_5, window_bounds = array<i64: 32, 32>}, {pipeline_mode = #tpu.pipeline_mode<synchronous>, transform_indices = @transform_6, window_bounds = array<i64: 1, 32>}, {transform_indices = @transform_7, window_bounds = array<i64: 1, 16, 32>}]} {
    %c0 = arith.constant 0 : index
    %c0_0 = arith.constant 0 : index
    %c0_1 = arith.constant 0 : index
    %0 = vector.load %arg1[%c0, %c0_0, %c0_1] : memref<1x16x32xf32, #tpu.memory_space<vmem>>, vector<1x16x32xf32>
    %1 = vector.shape_cast %0 : vector<1x16x32xf32> to vector<16x32xf32>
    %c0_2 = arith.constant 0 : index
    %c0_3 = arith.constant 0 : index
    %c0_4 = arith.constant 0 : index
    %2 = vector.load %arg2[%c0_2, %c0_3, %c0_4] : memref<1x8x32xf32, #tpu.memory_space<vmem>>, vector<1x8x32xf32>
    %3 = vector.shape_cast %2 : vector<1x8x32xf32> to vector<8x32xf32>
    %c0_5 = arith.constant 0 : index
    %c0_6 = arith.constant 0 : index
    %c0_7 = arith.constant 0 : index
    %4 = vector.load %arg3[%c0_5, %c0_6, %c0_7] : memref<1x8x32xf32, #tpu.memory_space<vmem>>, vector<1x8x32xf32>
    %5 = vector.shape_cast %4 : vector<1x8x32xf32> to vector<8x32xf32>
    %6 = tpu.concatenate %3, %5 in 0 : vector<8x32xf32>, vector<8x32xf32> -> vector<16x32xf32>
    %c0_8 = arith.constant 0 : index
    %c0_9 = arith.constant 0 : index
    %7 = vector.load %arg4[%c0_8, %c0_9] : memref<32x32xf32, #tpu.memory_space<vmem>>, vector<32x32xf32>
    %cst = arith.constant dense<0.000000e+00> : vector<16x32xf32>
    %8 = tpu.matmul %1, %7, %cst {dimension_numbers = #tpu.dot_dimension_numbers<[1], [0], [0], [1], [0, 0, 1, 1], [], []>} : vector<16x32xf32>, vector<32x32xf32>, vector<16x32xf32> -> vector<16x32xf32>
    %c0_10 = arith.constant 0 : index
    %c0_11 = arith.constant 0 : index
    %9 = vector.load %arg5[%c0_10, %c0_11] : memref<32x64xf32, #tpu.memory_space<vmem>>, vector<32x64xf32>
    %cst_12 = arith.constant dense<0.000000e+00> : vector<16x64xf32>
    %10 = tpu.matmul %6, %9, %cst_12 {dimension_numbers = #tpu.dot_dimension_numbers<[1], [0], [0], [1], [0, 0, 1, 1], [], []>} : vector<16x32xf32>, vector<32x64xf32>, vector<16x64xf32> -> vector<16x64xf32>
    %11 = vector.extract_strided_slice %10 {offsets = [0, 0], sizes = [16, 32], strides = [1, 1]} : vector<16x64xf32> to vector<16x32xf32>
    %12 = vector.extract_strided_slice %10 {offsets = [0, 32], sizes = [16, 32], strides = [1, 1]} : vector<16x64xf32> to vector<16x32xf32>
    %c0_13 = arith.constant 0 : index
    %c0_14 = arith.constant 0 : index
    %13 = vector.load %arg7[%c0_13, %c0_14] : memref<1x32xf32, #tpu.memory_space<vmem>>, vector<1x32xf32>
    %14 = vector.shape_cast %13 : vector<1x32xf32> to vector<1x32xf32>
    %15 = vector.broadcast %14 : vector<1x32xf32> to vector<16x32xf32>
    %16 = vector.extract_strided_slice %8 {offsets = [0, 0], sizes = [16, 8], strides = [1, 1]} : vector<16x32xf32> to vector<16x8xf32>
    %17 = vector.extract_strided_slice %11 {offsets = [0, 0], sizes = [16, 8], strides = [1, 1]} : vector<16x32xf32> to vector<16x8xf32>
    %18 = vector.extract_strided_slice %12 {offsets = [0, 0], sizes = [16, 8], strides = [1, 1]} : vector<16x32xf32> to vector<16x8xf32>
    %cst_15 = arith.constant dense<0.000000e+00> : vector<16x16xf32>
    %19 = tpu.matmul %16, %17, %cst_15 {dimension_numbers = #tpu.dot_dimension_numbers<[1], [1], [0], [0], [0, 0, 1, 0], [], []>} : vector<16x8xf32>, vector<16x8xf32>, vector<16x16xf32> -> vector<16x16xf32>
    %cst_16 = arith.constant dense<0xFF800000> : vector<16xf32>
    %20 = vector.multi_reduction <maximumf>, %19, %cst_16 [1] : vector<16x16xf32> to vector<16xf32>
    %21 = vector.shape_cast %20 : vector<16xf32> to vector<16x1xf32>
    %22 = vector.broadcast %21 : vector<16x1xf32> to vector<16x16xf32>
    %23 = arith.subf %19, %22 : vector<16x16xf32>
    %24 = math.exp %23 : vector<16x16xf32>
    %cst_17 = arith.constant dense<0.000000e+00> : vector<16xf32>
    %25 = vector.multi_reduction <add>, %24, %cst_17 [1] : vector<16x16xf32> to vector<16xf32>
    %26 = vector.shape_cast %25 : vector<16xf32> to vector<16x1xf32>
    %cst_18 = arith.constant dense<0.000000e+00> : vector<16x8xf32>
    %27 = tpu.matmul %24, %18, %cst_18 {dimension_numbers = #tpu.dot_dimension_numbers<[1], [0], [0], [1], [0, 0, 1, 1], [], []>} : vector<16x16xf32>, vector<16x8xf32>, vector<16x8xf32> -> vector<16x8xf32>
    %28 = tpu.reciprocal %26 : vector<16x1xf32> -> vector<16x1xf32>
    %29 = vector.broadcast %28 : vector<16x1xf32> to vector<16x8xf32>
    %30 = arith.mulf %27, %29 : vector<16x8xf32>
    %c0_19 = arith.constant 0 : index
    %c0_20 = arith.constant 0 : index
    %31 = vector.load %arg6[%c0_19, %c0_20] : memref<32x32xf32, #tpu.memory_space<vmem>>, vector<8x32xf32>
    %cst_21 = arith.constant dense<0.000000e+00> : vector<16x32xf32>
    %32 = tpu.matmul %30, %31, %cst_21 {dimension_numbers = #tpu.dot_dimension_numbers<[1], [0], [0], [1], [0, 0, 1, 1], [], []>} : vector<16x8xf32>, vector<8x32xf32>, vector<16x32xf32> -> vector<16x32xf32>
    %33 = arith.addf %15, %32 : vector<16x32xf32>
    %34 = vector.extract_strided_slice %8 {offsets = [0, 8], sizes = [16, 8], strides = [1, 1]} : vector<16x32xf32> to vector<16x8xf32>
    %35 = vector.extract_strided_slice %11 {offsets = [0, 8], sizes = [16, 8], strides = [1, 1]} : vector<16x32xf32> to vector<16x8xf32>
    %36 = vector.extract_strided_slice %12 {offsets = [0, 8], sizes = [16, 8], strides = [1, 1]} : vector<16x32xf32> to vector<16x8xf32>
    %cst_22 = arith.constant dense<0.000000e+00> : vector<16x16xf32>
    %37 = tpu.matmul %34, %35, %cst_22 {dimension_numbers = #tpu.dot_dimension_numbers<[1], [1], [0], [0], [0, 0, 1, 0], [], []>} : vector<16x8xf32>, vector<16x8xf32>, vector<16x16xf32> -> vector<16x16xf32>
    %cst_23 = arith.constant dense<0xFF800000> : vector<16xf32>
    %38 = vector.multi_reduction <maximumf>, %37, %cst_23 [1] : vector<16x16xf32> to vector<16xf32>
    %39 = vector.shape_cast %38 : vector<16xf32> to vector<16x1xf32>
    %40 = vector.broadcast %39 : vector<16x1xf32> to vector<16x16xf32>
    %41 = arith.subf %37, %40 : vector<16x16xf32>
    %42 = math.exp %41 : vector<16x16xf32>
    %cst_24 = arith.constant dense<0.000000e+00> : vector<16xf32>
    %43 = vector.multi_reduction <add>, %42, %cst_24 [1] : vector<16x16xf32> to vector<16xf32>
    %44 = vector.shape_cast %43 : vector<16xf32> to vector<16x1xf32>
    %cst_25 = arith.constant dense<0.000000e+00> : vector<16x8xf32>
    %45 = tpu.matmul %42, %36, %cst_25 {dimension_numbers = #tpu.dot_dimension_numbers<[1], [0], [0], [1], [0, 0, 1, 1], [], []>} : vector<16x16xf32>, vector<16x8xf32>, vector<16x8xf32> -> vector<16x8xf32>
    %46 = tpu.reciprocal %44 : vector<16x1xf32> -> vector<16x1xf32>
    %47 = vector.broadcast %46 : vector<16x1xf32> to vector<16x8xf32>
    %48 = arith.mulf %45, %47 : vector<16x8xf32>
    %c8 = arith.constant 8 : index
    %c0_26 = arith.constant 0 : index
    %49 = vector.load %arg6[%c8, %c0_26] : memref<32x32xf32, #tpu.memory_space<vmem>>, vector<8x32xf32>
    %cst_27 = arith.constant dense<0.000000e+00> : vector<16x32xf32>
    %50 = tpu.matmul %48, %49, %cst_27 {dimension_numbers = #tpu.dot_dimension_numbers<[1], [0], [0], [1], [0, 0, 1, 1], [], []>} : vector<16x8xf32>, vector<8x32xf32>, vector<16x32xf32> -> vector<16x32xf32>
    %51 = arith.addf %33, %50 : vector<16x32xf32>
    %52 = vector.extract_strided_slice %8 {offsets = [0, 16], sizes = [16, 8], strides = [1, 1]} : vector<16x32xf32> to vector<16x8xf32>
    %53 = vector.extract_strided_slice %11 {offsets = [0, 16], sizes = [16, 8], strides = [1, 1]} : vector<16x32xf32> to vector<16x8xf32>
    %54 = vector.extract_strided_slice %12 {offsets = [0, 16], sizes = [16, 8], strides = [1, 1]} : vector<16x32xf32> to vector<16x8xf32>
    %cst_28 = arith.constant dense<0.000000e+00> : vector<16x16xf32>
    %55 = tpu.matmul %52, %53, %cst_28 {dimension_numbers = #tpu.dot_dimension_numbers<[1], [1], [0], [0], [0, 0, 1, 0], [], []>} : vector<16x8xf32>, vector<16x8xf32>, vector<16x16xf32> -> vector<16x16xf32>
    %cst_29 = arith.constant dense<0xFF800000> : vector<16xf32>
    %56 = vector.multi_reduction <maximumf>, %55, %cst_29 [1] : vector<16x16xf32> to vector<16xf32>
    %57 = vector.shape_cast %56 : vector<16xf32> to vector<16x1xf32>
    %58 = vector.broadcast %57 : vector<16x1xf32> to vector<16x16xf32>
    %59 = arith.subf %55, %58 : vector<16x16xf32>
    %60 = math.exp %59 : vector<16x16xf32>
    %cst_30 = arith.constant dense<0.000000e+00> : vector<16xf32>
    %61 = vector.multi_reduction <add>, %60, %cst_30 [1] : vector<16x16xf32> to vector<16xf32>
    %62 = vector.shape_cast %61 : vector<16xf32> to vector<16x1xf32>
    %cst_31 = arith.constant dense<0.000000e+00> : vector<16x8xf32>
    %63 = tpu.matmul %60, %54, %cst_31 {dimension_numbers = #tpu.dot_dimension_numbers<[1], [0], [0], [1], [0, 0, 1, 1], [], []>} : vector<16x16xf32>, vector<16x8xf32>, vector<16x8xf32> -> vector<16x8xf32>
    %64 = tpu.reciprocal %62 : vector<16x1xf32> -> vector<16x1xf32>
    %65 = vector.broadcast %64 : vector<16x1xf32> to vector<16x8xf32>
    %66 = arith.mulf %63, %65 : vector<16x8xf32>
    %c16 = arith.constant 16 : index
    %c0_32 = arith.constant 0 : index
    %67 = vector.load %arg6[%c16, %c0_32] : memref<32x32xf32, #tpu.memory_space<vmem>>, vector<8x32xf32>
    %cst_33 = arith.constant dense<0.000000e+00> : vector<16x32xf32>
    %68 = tpu.matmul %66, %67, %cst_33 {dimension_numbers = #tpu.dot_dimension_numbers<[1], [0], [0], [1], [0, 0, 1, 1], [], []>} : vector<16x8xf32>, vector<8x32xf32>, vector<16x32xf32> -> vector<16x32xf32>
    %69 = arith.addf %51, %68 : vector<16x32xf32>
    %70 = vector.extract_strided_slice %8 {offsets = [0, 24], sizes = [16, 8], strides = [1, 1]} : vector<16x32xf32> to vector<16x8xf32>
    %71 = vector.extract_strided_slice %11 {offsets = [0, 24], sizes = [16, 8], strides = [1, 1]} : vector<16x32xf32> to vector<16x8xf32>
    %72 = vector.extract_strided_slice %12 {offsets = [0, 24], sizes = [16, 8], strides = [1, 1]} : vector<16x32xf32> to vector<16x8xf32>
    %cst_34 = arith.constant dense<0.000000e+00> : vector<16x16xf32>
    %73 = tpu.matmul %70, %71, %cst_34 {dimension_numbers = #tpu.dot_dimension_numbers<[1], [1], [0], [0], [0, 0, 1, 0], [], []>} : vector<16x8xf32>, vector<16x8xf32>, vector<16x16xf32> -> vector<16x16xf32>
    %cst_35 = arith.constant dense<0xFF800000> : vector<16xf32>
    %74 = vector.multi_reduction <maximumf>, %73, %cst_35 [1] : vector<16x16xf32> to vector<16xf32>
    %75 = vector.shape_cast %74 : vector<16xf32> to vector<16x1xf32>
    %76 = vector.broadcast %75 : vector<16x1xf32> to vector<16x16xf32>
    %77 = arith.subf %73, %76 : vector<16x16xf32>
    %78 = math.exp %77 : vector<16x16xf32>
    %cst_36 = arith.constant dense<0.000000e+00> : vector<16xf32>
    %79 = vector.multi_reduction <add>, %78, %cst_36 [1] : vector<16x16xf32> to vector<16xf32>
    %80 = vector.shape_cast %79 : vector<16xf32> to vector<16x1xf32>
    %cst_37 = arith.constant dense<0.000000e+00> : vector<16x8xf32>
    %81 = tpu.matmul %78, %72, %cst_37 {dimension_numbers = #tpu.dot_dimension_numbers<[1], [0], [0], [1], [0, 0, 1, 1], [], []>} : vector<16x16xf32>, vector<16x8xf32>, vector<16x8xf32> -> vector<16x8xf32>
    %82 = tpu.reciprocal %80 : vector<16x1xf32> -> vector<16x1xf32>
    %83 = vector.broadcast %82 : vector<16x1xf32> to vector<16x8xf32>
    %84 = arith.mulf %81, %83 : vector<16x8xf32>
    %c24 = arith.constant 24 : index
    %c0_38 = arith.constant 0 : index
    %85 = vector.load %arg6[%c24, %c0_38] : memref<32x32xf32, #tpu.memory_space<vmem>>, vector<8x32xf32>
    %cst_39 = arith.constant dense<0.000000e+00> : vector<16x32xf32>
    %86 = tpu.matmul %84, %85, %cst_39 {dimension_numbers = #tpu.dot_dimension_numbers<[1], [0], [0], [1], [0, 0, 1, 1], [], []>} : vector<16x8xf32>, vector<8x32xf32>, vector<16x32xf32> -> vector<16x32xf32>
    %87 = arith.addf %69, %86 : vector<16x32xf32>
    %c0_40 = arith.constant 0 : index
    %c0_41 = arith.constant 0 : index
    %c0_42 = arith.constant 0 : index
    %88 = vector.load %arg8[%c0_40, %c0_41, %c0_42] : memref<1x16x32xf32, #tpu.memory_space<vmem>>, vector<1x16x32xf32>
    %89 = vector.shape_cast %88 : vector<1x16x32xf32> to vector<16x32xf32>
    %90 = vector.shape_cast %87 : vector<16x32xf32> to vector<1x16x32xf32>
    tpu.vector_store %arg8[%c0_40, %c0_41, %c0_42], %90 {strides = array<i32>} : memref<1x16x32xf32, #tpu.memory_space<vmem>>, vector<1x16x32xf32>,
    return
  }
  func.func @transform_0(%arg0: i32) -> (i32, i32, i32) {
    %c0_i32 = arith.constant 0 : i32
    %c0_i32_0 = arith.constant 0 : i32
    %c0_i32_1 = arith.constant 0 : i32
    return %arg0, %c0_i32, %c0_i32_0 : i32, i32, i32
  }
  func.func @transform_1(%arg0: i32) -> (i32, i32, i32) {
    %c0_i32 = arith.constant 0 : i32
    %c0_i32_0 = arith.constant 0 : i32
    %c0_i32_1 = arith.constant 0 : i32
    return %arg0, %c0_i32, %c0_i32_0 : i32, i32, i32
  }
  func.func @transform_2(%arg0: i32) -> (i32, i32, i32) {
    %c0_i32 = arith.constant 0 : i32
    %c0_i32_0 = arith.constant 0 : i32
    %c0_i32_1 = arith.constant 0 : i32
    return %arg0, %c0_i32, %c0_i32_0 : i32, i32, i32
  }
  func.func @transform_3(%arg0: i32) -> (i32, i32) {
    %c0_i32 = arith.constant 0 : i32
    %c0_i32_0 = arith.constant 0 : i32
    %c0_i32_1 = arith.constant 0 : i32
    return %c0_i32, %c0_i32_0 : i32, i32
  }
  func.func @transform_4(%arg0: i32) -> (i32, i32) {
    %c0_i32 = arith.constant 0 : i32
    %c0_i32_0 = arith.constant 0 : i32
    %c0_i32_1 = arith.constant 0 : i32
    return %c0_i32, %c0_i32_0 : i32, i32
  }
  func.func @transform_5(%arg0: i32) -> (i32, i32) {
    %c0_i32 = arith.constant 0 : i32
    %c0_i32_0 = arith.constant 0 : i32
    %c0_i32_1 = arith.constant 0 : i32
    return %c0_i32, %c0_i32_0 : i32, i32
  }
  func.func @transform_6(%arg0: i32) -> (i32, i32) {
    %c0_i32 = arith.constant 0 : i32
    %c0_i32_0 = arith.constant 0 : i32
    %c0_i32_1 = arith.constant 0 : i32
    return %c0_i32, %c0_i32_0 : i32, i32
  }
  func.func @transform_7(%arg0: i32) -> (i32, i32, i32) {
    %c0_i32 = arith.constant 0 : i32
    %c0_i32_0 = arith.constant 0 : i32
    %c0_i32_1 = arith.constant 0 : i32
    return %arg0, %c0_i32, %c0_i32_0 : i32, i32, i32
  }
}

</mosaic_0001>

<llo_original>
// kernel: tpu_custom_call.1
$region0: #{tpu_custom_call.1}
  #allocation0 [shape = 'u32[]', space=smem, size = 0x4, offset = 0x4, fixed_abs, tag = 'smem constant byte address 0x4 - core index']
  #allocation1 [shape = 'u32[144,128]{1,0:T(1,128)}', space=vmem, size = 0x12000, scoped, tag = 'internal scratch']
  %s0 = inlined_call_operand.hbm [shape: f32[2,16,32], index: 0, kind: input, shape index: {}]
  %s1 = inlined_call_operand.hbm [shape: f32[2,8,32], index: 1, kind: input, shape index: {}]
  %s2 = inlined_call_operand.hbm [shape: f32[2,8,32], index: 2, kind: input, shape index: {}]
  %s3 = inlined_call_operand.hbm [shape: f32[32,32], index: 3, kind: input, shape index: {}]
  %s4 = inlined_call_operand.hbm [shape: f32[32,64], index: 4, kind: input, shape index: {}]
  %s5 = inlined_call_operand.hbm [shape: f32[32,32], index: 5, kind: input, shape index: {}]
  %s6 = inlined_call_operand.vmem [shape: f32[1,32], index: 6, kind: input, shape index: {}]
  %s7 = inlined_call_operand.hbm [shape: f32[2,16,32], index: 7, kind: output, shape index: {}]
  %s8 = sld [smem:[#allocation0]]
  $region85: #{tpu_custom_call.1} parent=0
    _
  %s10 = ssub.s32 1, %s8
  %s11 = scalar_select 0, %s10, %s8
  $region1: #{tpu_custom_call.1} parent=0
    #allocation2 [shape = 'u8[16384]{0}', space=vmem, size = 0x4000, scoped, tag = 'input window, operand 0']
    #allocation3 [shape = 's32[2]{0}', space=sflag, size = 0x8, scoped, tag = 'scoped memory for tpu_custom_call.1']
    #allocation4 [shape = 's32[2]{0}', space=sflag, size = 0x8, scoped, tag = 'scoped memory for tpu_custom_call.1']
    #allocation5 [shape = 'u8[8192]{0}', space=vmem, size = 0x2000, scoped, tag = 'input window, operand 1']
    #allocation6 [shape = 's32[2]{0}', space=sflag, size = 0x8, scoped, tag = 'scoped memory for tpu_custom_call.1']
    #allocation7 [shape = 'u8[8192]{0}', space=vmem, size = 0x2000, scoped, tag = 'input window, operand 2']
    #allocation8 [shape = 'u8[16384]{0}', space=vmem, size = 0x4000, scoped, tag = 'input window, operand 3, single buffered']
    #allocation9 [shape = 's32[1]{0}', space=sflag, size = 0x4, scoped, tag = 'scoped memory for tpu_custom_call.1']
    #allocation10 [shape = 'u8[16384]{0}', space=vmem, size = 0x4000, scoped, tag = 'input window, operand 4, single buffered']
    #allocation11 [shape = 'u8[16384]{0}', space=vmem, size = 0x4000, scoped, tag = 'input window, operand 5, single buffered']
    #allocation12 [shape = 's32[1]{0}', space=sflag, size = 0x4, scoped, tag = 'scoped memory for tpu_custom_call.1']
    #allocation13 [shape = 'u8[16384]{0}', space=vmem, size = 0x4000, scoped, tag = 'output window, operand 0']
    %12 = vsyncpa [#allocation3], 0
    %s13 = scalar_lea.sflag [#allocation3], 1
    %14 = vsyncpa %s13, 0
    %15 = vsyncpa [#allocation6], 0
    %s16 = scalar_lea.sflag [#allocation6], 1
    %17 = vsyncpa %s16, 0
    %18 = vsyncpa [#allocation9], 0
    %19 = vsyncpa [#allocation12], 0
    %20 = vsyncpa [#allocation4], 0
    %s21 = scalar_lea.sflag [#allocation4], 1
    %22 = vsyncpa %s21, 0
    loop: start=0, step=1, limit=4
    $region2: #{tpu_custom_call.1} parent=1 // loop_pre_header
      _
    $region3: #{tpu_custom_call.1} parent=1 // loop_header
      %s24 = sphi 0, %s28
      %p25 = scmp.ge.s32.totalorder %s24, 4
      %s34 = sphi 0, %s36
      %s37 = sphi 0, %s34
      %s38 = sphi 0, %s37
      %s54 = sphi 0, %s38
      %s60 = sphi 0, %s62
      %s63 = sphi 0, %s60
      %s64 = sphi 0, %s63
      %s80 = sphi 0, %s64
      %s86 = sphi 0, %s88
      %s89 = sphi 0, %s86
      %s90 = sphi 0, %s89
      %s106 = sphi 0, %s90
      %s110 = sphi 0, %s110
      %s112 = sphi 0, %s110
      %s113 = sphi 0, %s112
      %s127 = sphi 0, %s113
      %s131 = sphi 0, %s131
      %s133 = sphi 0, %s131
      %s134 = sphi 0, %s133
      %s148 = sphi 0, %s134
      %s152 = sphi 0, %s152
      %s154 = sphi 0, %s152
      %s155 = sphi 0, %s154
      %s169 = sphi 0, %s155
      %s173 = sphi 0, %s173
      %s175 = sphi 0, %s173
      %s176 = sphi 0, %s175
      %s190 = sphi 0, %s176
      %s196 = sphi 0, %s198
      %s199 = sphi 0, %s196
      %s200 = sphi 0, %s199
      %s216 = sphi 0, %s200
    $region4: #{tpu_custom_call.1} parent=1 // loop_header_branch
      %27 = sbr.rel (%p25) target = $region8
    $region5: #{tpu_custom_call.1} parent=1 // loop_body
      %s29 = ssub.s32 %s24, 1
      %s30 = ssub.s32 %s24, 2
      %s31 = sadd.s32 %s24, 1
      %s32 = ssub.s32 %s24, %s31
      %p33 = scmp.eq.s32.totalorder %s32, 0
      %s35 = sadd.s32 %s34, 1
      %s36 = scalar_select %p33, %s34, %s35
      %p39 = pneg %p33
      %p40 = scmp.eq.s32.totalorder %s24, 1
      %p41 = por %p39, %p40
      %p42 = scmp.ne.s32.totalorder %s34, %s37
      %p43 = scmp.eq.s32.totalorder %s24, 0
      %p44 = por %p42, %p43
      %p45 = scmp.ne.s32.totalorder %s34, %s37
      %p46 = scmp.eq.s32.totalorder %s29, 1
      %p47 = por %p45, %p46
      %p48 = scmp.ne.s32.totalorder %s37, %s38
      %p49 = scmp.eq.s32.totalorder %s29, 0
      %p50 = por %p48, %p49
      %p51 = scmp.ne.s32.totalorder %s37, %s38
      %p52 = scmp.eq.s32.totalorder %s30, 1
      %p53 = por %p51, %p52
      %p55 = scmp.ne.s32.totalorder %s38, %s54
      %p56 = scmp.eq.s32.totalorder %s30, 0
      %p57 = por %p55, %p56
      %s58 = ssub.s32 %s24, %s31
      %p59 = scmp.eq.s32.totalorder %s58, 0
      %s61 = sadd.s32 %s60, 1
      %s62 = scalar_select %p59, %s60, %s61
      %p65 = pneg %p59
      %p66 = scmp.eq.s32.totalorder %s24, 1
      %p67 = por %p65, %p66
      %p68 = scmp.ne.s32.totalorder %s60, %s63
      %p69 = scmp.eq.s32.totalorder %s24, 0
      %p70 = por %p68, %p69
      %p71 = scmp.ne.s32.totalorder %s60, %s63
      %p72 = scmp.eq.s32.totalorder %s29, 1
      %p73 = por %p71, %p72
      %p74 = scmp.ne.s32.totalorder %s63, %s64
      %p75 = scmp.eq.s32.totalorder %s29, 0
      %p76 = por %p74, %p75
      %p77 = scmp.ne.s32.totalorder %s63, %s64
      %p78 = scmp.eq.s32.totalorder %s30, 1
      %p79 = por %p77, %p78
      %p81 = scmp.ne.s32.totalorder %s64, %s80
      %p82 = scmp.eq.s32.totalorder %s30, 0
      %p83 = por %p81, %p82
      %s84 = ssub.s32 %s24, %s31
      %p85 = scmp.eq.s32.totalorder %s84, 0
      %s87 = sadd.s32 %s86, 1
      %s88 = scalar_select %p85, %s86, %s87
      %p91 = pneg %p85
      %p92 = scmp.eq.s32.totalorder %s24, 1
      %p93 = por %p91, %p92
      %p94 = scmp.ne.s32.totalorder %s86, %s89
      %p95 = scmp.eq.s32.totalorder %s24, 0
      %p96 = por %p94, %p95
      %p97 = scmp.ne.s32.totalorder %s86, %s89
      %p98 = scmp.eq.s32.totalorder %s29, 1
      %p99 = por %p97, %p98
      %p100 = scmp.ne.s32.totalorder %s89, %s90
      %p101 = scmp.eq.s32.totalorder %s29, 0
      %p102 = por %p100, %p101
      %p103 = scmp.ne.s32.totalorder %s89, %s90
      %p104 = scmp.eq.s32.totalorder %s30, 1
      %p105 = por %p103, %p104
      %p107 = scmp.ne.s32.totalorder %s90, %s106
      %p108 = scmp.eq.s32.totalorder %s30, 0
      %p109 = por %p107, %p108
      %s111 = sadd.s32 %s110, 1
      %p114 = scmp.eq.s32.totalorder %s24, 1
      %p115 = scmp.ne.s32.totalorder %s110, %s112
      %p116 = scmp.eq.s32.totalorder %s24, 0
      %p117 = por %p115, %p116
      %p118 = scmp.ne.s32.totalorder %s110, %s112
      %p119 = scmp.eq.s32.totalorder %s29, 1
      %p120 = por %p118, %p119
      %p121 = scmp.ne.s32.totalorder %s112, %s113
      %p122 = scmp.eq.s32.totalorder %s29, 0
      %p123 = por %p121, %p122
      %p124 = scmp.ne.s32.totalorder %s112, %s113
      %p125 = scmp.eq.s32.totalorder %s30, 1
      %p126 = por %p124, %p125
      %p128 = scmp.ne.s32.totalorder %s113, %s127
      %p129 = scmp.eq.s32.totalorder %s30, 0
      %p130 = por %p128, %p129
      %s132 = sadd.s32 %s131, 1
      %p135 = scmp.eq.s32.totalorder %s24, 1
      %p136 = scmp.ne.s32.totalorder %s131, %s133
      %p137 = scmp.eq.s32.totalorder %s24, 0
      %p138 = por %p136, %p137
      %p139 = scmp.ne.s32.totalorder %s131, %s133
      %p140 = scmp.eq.s32.totalorder %s29, 1
      %p141 = por %p139, %p140
      %p142 = scmp.ne.s32.totalorder %s133, %s134
      %p143 = scmp.eq.s32.totalorder %s29, 0
      %p144 = por %p142, %p143
      %p145 = scmp.ne.s32.totalorder %s133, %s134
      %p146 = scmp.eq.s32.totalorder %s30, 1
      %p147 = por %p145, %p146
      %p149 = scmp.ne.s32.totalorder %s134, %s148
      %p150 = scmp.eq.s32.totalorder %s30, 0
      %p151 = por %p149, %p150
      %s153 = sadd.s32 %s152, 1
      %p156 = scmp.eq.s32.totalorder %s24, 1
      %p157 = scmp.ne.s32.totalorder %s152, %s154
      %p158 = scmp.eq.s32.totalorder %s24, 0
      %p159 = por %p157, %p158
      %p160 = scmp.ne.s32.totalorder %s152, %s154
      %p161 = scmp.eq.s32.totalorder %s29, 1
      %p162 = por %p160, %p161
      %p163 = scmp.ne.s32.totalorder %s154, %s155
      %p164 = scmp.eq.s32.totalorder %s29, 0
      %p165 = por %p163, %p164
      %p166 = scmp.ne.s32.totalorder %s154, %s155
      %p167 = scmp.eq.s32.totalorder %s30, 1
      %p168 = por %p166, %p167
      %p170 = scmp.ne.s32.totalorder %s155, %s169
      %p171 = scmp.eq.s32.totalorder %s30, 0
      %p172 = por %p170, %p171
      %s174 = sadd.s32 %s173, 1
      %p177 = scmp.eq.s32.totalorder %s24, 1
      %p178 = scmp.ne.s32.totalorder %s173, %s175
      %p179 = scmp.eq.s32.totalorder %s24, 0
      %p180 = por %p178, %p179
      %p181 = scmp.ne.s32.totalorder %s173, %s175
      %p182 = scmp.eq.s32.totalorder %s29, 1
      %p183 = por %p181, %p182
      %p184 = scmp.ne.s32.totalorder %s175, %s176
      %p185 = scmp.eq.s32.totalorder %s29, 0
      %p186 = por %p184, %p185
      %p187 = scmp.ne.s32.totalorder %s175, %s176
      %p188 = scmp.eq.s32.totalorder %s30, 1
      %p189 = por %p187, %p188
      %p191 = scmp.ne.s32.totalorder %s176, %s190
      %p192 = scmp.eq.s32.totalorder %s30, 0
      %p193 = por %p191, %p192
      %s194 = ssub.s32 %s24, %s31
      %p195 = scmp.eq.s32.totalorder %s194, 0
      %s197 = sadd.s32 %s196, 1
      %s198 = scalar_select %p195, %s196, %s197
      %p201 = pneg %p195
      %p202 = scmp.eq.s32.totalorder %s24, 1
      %p203 = por %p201, %p202
      %p204 = scmp.ne.s32.totalorder %s196, %s199
      %p205 = scmp.eq.s32.totalorder %s24, 0
      %p206 = por %p204, %p205
      %p207 = scmp.ne.s32.totalorder %s196, %s199
      %p208 = scmp.eq.s32.totalorder %s29, 1
      %p209 = por %p207, %p208
      %p210 = scmp.ne.s32.totalorder %s199, %s200
      %p211 = scmp.eq.s32.totalorder %s29, 0
      %p212 = por %p210, %p211
      %p213 = scmp.ne.s32.totalorder %s199, %s200
      %p214 = scmp.eq.s32.totalorder %s30, 1
      %p215 = por %p213, %p214
      %p217 = scmp.ne.s32.totalorder %s200, %s216
      %p218 = scmp.eq.s32.totalorder %s30, 0
      %p219 = por %p217, %p218
      %p220 = scmp.le.s32.totalorder 1, %s24
      %p221 = scmp.lt.s32.totalorder %s24, 3
      %p222 = pnand %p220, %p221
      %p223 = pneg %p222
      // Predicated region
      $region9: #{tpu_custom_call.1} parent=5 // pred_check
        _
      $region10: #{tpu_custom_call.1} parent=5 // pred_check_branch
        %225 = sbr.rel (%p222) target = $region12
      $region11: #{tpu_custom_call.1} parent=5 // pred_region
        %s226 = ssub.s32 %s24, 1
        // Predicated region
        $region13: #{tpu_custom_call.1} parent=11 // pred_check
          %p227 = pneg %p123
        $region14: #{tpu_custom_call.1} parent=11 // pred_check_branch
          %229 = sbr.rel (%p227) target = $region16
        $region15: #{tpu_custom_call.1} parent=11 // pred_region
          %s231 = ssub.s32 512, 512
          %232 = vsyncadd [#allocation9], %s231
          %s233 = sshll.u32 [#allocation8], 4
          %s234 = int_to_ptr.vmem [resolvable:$true] %s233
          %239 = dma.hbm_to_vmem [thread:$0]  %s3, 512, %s234, [#allocation9], 128, 128, 8
        $region16: #{tpu_custom_call.1} parent=11 // pred_fallthru
          _
        // Predicated region
        $region17: #{tpu_custom_call.1} parent=11 // pred_check
          %p240 = pneg %p144
        $region18: #{tpu_custom_call.1} parent=11 // pred_check_branch
          %242 = sbr.rel (%p240) target = $region20
        $region19: #{tpu_custom_call.1} parent=11 // pred_region
          %s244 = ssub.s32 512, 512
          %245 = vsyncadd [#allocation9], %s244
          %s246 = sshll.u32 [#allocation10], 4
          %s247 = int_to_ptr.vmem [resolvable:$true] %s246
          %252 = dma.hbm_to_vmem [thread:$0]  %s4, 512, %s247, [#allocation9], 128, 128, 8
        $region20: #{tpu_custom_call.1} parent=11 // pred_fallthru
          _
        // Predicated region
        $region21: #{tpu_custom_call.1} parent=11 // pred_check
          %p253 = pneg %p165
        $region22: #{tpu_custom_call.1} parent=11 // pred_check_branch
          %255 = sbr.rel (%p253) target = $region24
        $region23: #{tpu_custom_call.1} parent=11 // pred_region
          %s257 = ssub.s32 512, 512
          %258 = vsyncadd [#allocation12], %s257
          %s259 = sshll.u32 [#allocation11], 4
          %s260 = int_to_ptr.vmem [resolvable:$true] %s259
          %265 = dma.hbm_to_vmem [thread:$0]  %s5, 512, %s260, [#allocation12], 128, 128, 8
        $region24: #{tpu_custom_call.1} parent=11 // pred_fallthru
          _
        // Predicated region
        $region25: #{tpu_custom_call.1} parent=11 // pred_check
          %p266 = pneg %p186
        $region26: #{tpu_custom_call.1} parent=11 // pred_check_branch
          %268 = sbr.rel (%p266) target = $region28
        $region27: #{tpu_custom_call.1} parent=11 // pred_region
          _
        $region28: #{tpu_custom_call.1} parent=11 // pred_fallthru
          _
      $region12: #{tpu_custom_call.1} parent=5 // pred_fallthru
        _
      %p269 = scmp.lt.s32.totalorder %s24, 2
      // Predicated region
      $region29: #{tpu_custom_call.1} parent=5 // pred_check
        %p270 = pneg %p269
      $region30: #{tpu_custom_call.1} parent=5 // pred_check_branch
        %272 = sbr.rel (%p270) target = $region32
      $region31: #{tpu_custom_call.1} parent=5 // pred_region
        // Predicated region
        $region33: #{tpu_custom_call.1} parent=31 // pred_check
          %p273 = pneg %p44
        $region34: #{tpu_custom_call.1} parent=31 // pred_check_branch
          %275 = sbr.rel (%p273) target = $region36
        $region35: #{tpu_custom_call.1} parent=31 // pred_region
          %s276 = sand.u32 %s34, 1
          %s277 = scalar_lea.sflag [#allocation3], %s276
          %s278 = sand.u32 %s34, 1
          %s279 = smul.addr %s278, 16
          %s280 = scalar_lea.vmem [#allocation2], %s279
          %s282 = ssub.s32 256, 256
          %283 = vsyncadd %s277, %s282
          %s284 = smul.addr %s24, 2
          %s285 = smul.addr %s284, 128
          %s286 = scalar_lea.hbm %s0, %s285
          %s287 = sshll.u32 %s280, 4
          %s288 = int_to_ptr.vmem [resolvable:$true] %s287
          %293 = dma.hbm_to_vmem [thread:$0]  %s286, 256, %s288, %s277, 128, 128, 8
        $region36: #{tpu_custom_call.1} parent=31 // pred_fallthru
          _
        // Predicated region
        $region37: #{tpu_custom_call.1} parent=31 // pred_check
          %p294 = pneg %p70
        $region38: #{tpu_custom_call.1} parent=31 // pred_check_branch
          %296 = sbr.rel (%p294) target = $region40
        $region39: #{tpu_custom_call.1} parent=31 // pred_region
          %s297 = sand.u32 %s24, 1
          %s298 = scalar_lea.sflag [#allocation6], %s297
          %s299 = sand.u32 %s60, 1
          %s300 = smul.addr %s299, 8
          %s301 = scalar_lea.vmem [#allocation5], %s300
          %s303 = ssub.s32 128, 128
          %304 = vsyncadd %s298, %s303
          %s305 = smul.addr %s24, 128
          %s306 = scalar_lea.hbm %s1, %s305
          %s308 = sshll.u32 %s301, 4
          %s309 = int_to_ptr.vmem [resolvable:$true] %s308
          %311 = dma.hbm_to_vmem [thread:$0]  %s306, 128, %s309, %s298
        $region40: #{tpu_custom_call.1} parent=31 // pred_fallthru
          _
        // Predicated region
        $region41: #{tpu_custom_call.1} parent=31 // pred_check
          %p312 = pneg %p96
        $region42: #{tpu_custom_call.1} parent=31 // pred_check_branch
          %314 = sbr.rel (%p312) target = $region44
        $region43: #{tpu_custom_call.1} parent=31 // pred_region
          %s315 = sand.u32 %s24, 1
          %s316 = scalar_lea.sflag [#allocation6], %s315
          %s317 = sand.u32 %s86, 1
          %s318 = smul.addr %s317, 8
          %s319 = scalar_lea.vmem [#allocation7], %s318
          %s321 = ssub.s32 128, 128
          %322 = vsyncadd %s316, %s321
          %s323 = smul.addr %s24, 128
          %s324 = scalar_lea.hbm %s2, %s323
          %s326 = sshll.u32 %s319, 4
          %s327 = int_to_ptr.vmem [resolvable:$true] %s326
          %329 = dma.hbm_to_vmem [thread:$0]  %s324, 128, %s327, %s316
        $region44: #{tpu_custom_call.1} parent=31 // pred_fallthru
          _
      $region32: #{tpu_custom_call.1} parent=5 // pred_fallthru
        _
      %p330 = scmp.le.s32.totalorder 1, %s24
      %p331 = scmp.lt.s32.totalorder %s24, 3
      %p332 = pnand %p330, %p331
      %p333 = pneg %p332
      // Predicated region
      $region45: #{tpu_custom_call.1} parent=5 // pred_check
        _
      $region46: #{tpu_custom_call.1} parent=5 // pred_check_branch
        %335 = sbr.rel (%p332) target = $region48
      $region47: #{tpu_custom_call.1} parent=5 // pred_region
        %s336 = ssub.s32 %s24, 1
        %s337 = sand.u32 %s37, 1
        %s338 = scalar_lea.sflag [#allocation3], %s337
        %s339 = sand.u32 %s37, 1
        %s340 = smul.addr %s339, 16
        %s341 = scalar_lea.vmem [#allocation2], %s340
        // Predicated region
        $region49: #{tpu_custom_call.1} parent=47 // pred_check
          %p342 = pneg %p50
        $region50: #{tpu_custom_call.1} parent=47 // pred_check_branch
          %344 = sbr.rel (%p342) target = $region52
        $region51: #{tpu_custom_call.1} parent=47 // pred_region
          %345 = dma.done %s338, 256
        $region52: #{tpu_custom_call.1} parent=47 // pred_fallthru
          _
        %s346 = sand.u32 %s29, 1
        %s347 = scalar_lea.sflag [#allocation6], %s346
        %s348 = sand.u32 %s63, 1
        %s349 = smul.addr %s348, 8
        %s350 = scalar_lea.vmem [#allocation5], %s349
        // Predicated region
        $region53: #{tpu_custom_call.1} parent=47 // pred_check
          %p351 = pneg %p76
        $region54: #{tpu_custom_call.1} parent=47 // pred_check_branch
          %353 = sbr.rel (%p351) target = $region56
        $region55: #{tpu_custom_call.1} parent=47 // pred_region
          %354 = dma.done %s347, 128
        $region56: #{tpu_custom_call.1} parent=47 // pred_fallthru
          _
        %s355 = sand.u32 %s29, 1
        %s356 = scalar_lea.sflag [#allocation6], %s355
        %s357 = sand.u32 %s89, 1
        %s358 = smul.addr %s357, 8
        %s359 = scalar_lea.vmem [#allocation7], %s358
        // Predicated region
        $region57: #{tpu_custom_call.1} parent=47 // pred_check
          %p360 = pneg %p102
        $region58: #{tpu_custom_call.1} parent=47 // pred_check_branch
          %362 = sbr.rel (%p360) target = $region60
        $region59: #{tpu_custom_call.1} parent=47 // pred_region
          %363 = dma.done %s356, 128
        $region60: #{tpu_custom_call.1} parent=47 // pred_fallthru
          _
        // Predicated region
        $region61: #{tpu_custom_call.1} parent=47 // pred_check
          %p364 = pneg %p123
        $region62: #{tpu_custom_call.1} parent=47 // pred_check_branch
          %366 = sbr.rel (%p364) target = $region64
        $region63: #{tpu_custom_call.1} parent=47 // pred_region
          %367 = dma.done [#allocation9], 512
        $region64: #{tpu_custom_call.1} parent=47 // pred_fallthru
          _
        // Predicated region
        $region65: #{tpu_custom_call.1} parent=47 // pred_check
          %p368 = pneg %p144
        $region66: #{tpu_custom_call.1} parent=47 // pred_check_branch
          %370 = sbr.rel (%p368) target = $region68
        $region67: #{tpu_custom_call.1} parent=47 // pred_region
          %371 = dma.done [#allocation9], 512
        $region68: #{tpu_custom_call.1} parent=47 // pred_fallthru
          _
        // Predicated region
        $region69: #{tpu_custom_call.1} parent=47 // pred_check
          %p372 = pneg %p165
        $region70: #{tpu_custom_call.1} parent=47 // pred_check_branch
          %374 = sbr.rel (%p372) target = $region72
        $region71: #{tpu_custom_call.1} parent=47 // pred_region
          %375 = dma.done [#allocation12], 512
        $region72: #{tpu_custom_call.1} parent=47 // pred_fallthru
          _
        %s376 = sand.u32 %s37, 1
        %s377 = scalar_lea.sflag [#allocation3], %s376
        %s378 = sand.u32 %s37, 1
        %s379 = smul.addr %s378, 16
        %s380 = scalar_lea.vmem [#allocation2], %s379
        %p381 = pneg %p50
        %p382 = pneg %p47
        %s383 = sand.u32 %s29, 1
        %s384 = scalar_lea.sflag [#allocation6], %s383
        %s385 = sand.u32 %s63, 1
        %s386 = smul.addr %s385, 8
        %s387 = scalar_lea.vmem [#allocation5], %s386
        %p388 = pneg %p76
        %p389 = pneg %p73
        %s390 = sand.u32 %s29, 1
        %s391 = scalar_lea.sflag [#allocation6], %s390
        %s392 = sand.u32 %s89, 1
        %s393 = smul.addr %s392, 8
        %s394 = scalar_lea.vmem [#allocation7], %s393
        %p395 = pneg %p102
        %p396 = pneg %p99
        %p397 = pneg %p123
        %p398 = pneg %p120
        %p399 = pneg %p144
        %p400 = pneg %p141
        %p401 = pneg %p165
        %p402 = pneg %p162
        %p403 = pneg %p186
        %p404 = pneg %p183
        %p405 = pneg %p212
        %p406 = pneg %p209
        %s407 = sand.u32 %s199, 1
        %s408 = scalar_lea.sflag [#allocation4], %s407
        %s409 = sand.u32 %s199, 1
        %s410 = smul.addr %s409, 16
        %s411 = scalar_lea.vmem [#allocation13], %s410
        %v412 = vld [vmem:[%s341] sm:$0xff]
        %v413 = vld [vmem:[%s341 + $0x8] sm:$0xff]
        %v414 = vld [vmem:[%s350] sm:$0xff]
        %v415 = vld [vmem:[%s359] sm:$0xff]
        %v416 = vld [vmem:[#allocation8] sm:$0xff]
        %v417 = vld [vmem:[#allocation8 + $0x8] sm:$0xff]
        %v418 = vld [vmem:[#allocation8 + $0x10] sm:$0xff]
        %v419 = vld [vmem:[#allocation8 + $0x18] sm:$0xff]
        %vm420 = vcmask 261120
        %v422 = vsel %vm420, %v412, 0
        %v425 = vsel %vm420, %v413, 0
        %427 = vmatprep.subr.mxu0 0.0
        %428 = vmatpush1.msra.mxu0 %v416
        %429 = vmatprep.subr.mxu0 0.0
        %430 = vmatpush1.msra.mxu0 %v417
        %431 = vmatprep.subr.mxu0 0.0
        %432 = vmatpush1.msra.mxu0 %v418
        %433 = vmatprep.subr.mxu0 0.0
        %434 = vmatpush1.msra.mxu0 %v419
        %435 = vmatprep.subr.mxu0 0.0
        %436 = vmatpush1.msra.mxu0 0.0
        %437 = vmatprep.subr.mxu0 0.0
        %438 = vmatpush1.msra.mxu0 0.0
        %439 = vmatprep.subr.mxu0 0.0
        %440 = vmatpush1.msra.mxu0 0.0
        %441 = vmatprep.subr.mxu0 0.0
        %442 = vmatpush1.msra.mxu0 0.0
        %443 = vmatprep.subr.mxu0 0.0
        %444 = vmatpush1.msra.mxu0 0.0
        %445 = vmatprep.subr.mxu0 0.0
        %446 = vmatpush1.msra.mxu0 0.0
        %447 = vmatprep.subr.mxu0 0.0
        %448 = vmatpush1.msra.mxu0 0.0
        %449 = vmatprep.subr.mxu0 0.0
        %450 = vmatpush1.msra.mxu0 0.0
        %451 = vmatprep.subr.mxu0 0.0
        %452 = vmatpush1.msra.mxu0 0.0
        %453 = vmatprep.subr.mxu0 0.0
        %454 = vmatpush1.msra.mxu0 0.0
        %455 = vmatprep.subr.mxu0 0.0
        %456 = vmatpush1.msra.mxu0 0.0
        %457 = vmatprep.subr.mxu0 0.0
        %458 = vmatpush1.msra.mxu0 0.0
        %459 = vmatprep.subr.mxu0 0.0
        %460 = vmatpush1.msra.mxu0 0.0
        %461 = vmatprep.subr.mxu0 0.0
        %462 = vmatpush1.msra.mxu0 0.0
        %463 = vmatprep.subr.mxu0 0.0
        %464 = vmatpush1.msra.mxu0 0.0
        %465 = vmatprep.subr.mxu0 0.0
        %466 = vmatpush1.msra.mxu0 0.0
        %467 = vmatprep.subr.mxu0 0.0
        %468 = vmatpush1.msra.mxu0 0.0
        %469 = vmatprep.subr.mxu0 0.0
        %470 = vmatpush1.msra.mxu0 0.0
        %471 = vmatprep.subr.mxu0 0.0
        %472 = vmatpush1.msra.mxu0 0.0
        %473 = vmatprep.subr.mxu0 0.0
        %474 = vmatpush1.msra.mxu0 0.0
        %475 = vmatprep.subr.mxu0 0.0
        %476 = vmatpush1.msra.mxu0 0.0
        %477 = vmatprep.subr.mxu0 0.0
        %478 = vmatpush1.msra.mxu0 0.0
        %479 = vmatprep.subr.mxu0 0.0
        %480 = vmatpush1.msra.mxu0 0.0
        %481 = vmatprep.subr.mxu0 0.0
        %482 = vmatpush1.msra.mxu0 0.0
        %483 = vmatprep.subr.mxu0 0.0
        %484 = vmatpush1.msra.mxu0 0.0
        %485 = vmatprep.subr.mxu0 0.0
        %486 = vmatpush1.msra.mxu0 0.0
        %487 = vmatprep.subr.mxu0 0.0
        %488 = vmatpush1.msra.mxu0 0.0
        %489 = vmatprep.subr.mxu0 0.0
        %490 = vmatpush1.msra.mxu0 0.0
        %491 = vmatprep.mubr.f32.mxu0 0.0
        %492 = vmatmul.mubr.f32.gmra.mrb[0].mxu0 %v422
        %v493 = vpop.f32.mrb[0].mxu0
        %v494 = vadd.f32 0.0, %v493
        %v495 = vpop.f32.mrb[0].mxu0
        %496 = vmatprep.mubr.f32.mxu0 0.0
        %497 = vmatmul.mubr.f32.gmra.mrb[0].mxu0 %v425
        %v498 = vpop.f32.mrb[0].mxu0
        %v499 = vadd.f32 0.0, %v498
        %v500 = vpop.f32.mrb[0].mxu0
        %501 = vdwg.mxu0
        %v502 = vld [vmem:[#allocation10] sm:$0xff]
        %v503 = vld [vmem:[#allocation10 + $0x8] sm:$0xff]
        %v504 = vld [vmem:[#allocation10 + $0x10] sm:$0xff]
        %v505 = vld [vmem:[#allocation10 + $0x18] sm:$0xff]
        %v507 = vsel %vm420, %v414, 0
        %v510 = vsel %vm420, %v415, 0
        %512 = vmatprep.subr.mxu0 0.0
        %513 = vmatpush1.msra.mxu0 %v502
        %514 = vmatprep.subr.mxu0 0.0
        %515 = vmatpush1.msra.mxu0 %v503
        %516 = vmatprep.subr.mxu0 0.0
        %517 = vmatpush1.msra.mxu0 %v504
        %518 = vmatprep.subr.mxu0 0.0
        %519 = vmatpush1.msra.mxu0 %v505
        %520 = vmatprep.subr.mxu0 0.0
        %521 = vmatpush1.msra.mxu0 0.0
        %522 = vmatprep.subr.mxu0 0.0
        %523 = vmatpush1.msra.mxu0 0.0
        %524 = vmatprep.subr.mxu0 0.0
        %525 = vmatpush1.msra.mxu0 0.0
        %526 = vmatprep.subr.mxu0 0.0
        %527 = vmatpush1.msra.mxu0 0.0
        %528 = vmatprep.subr.mxu0 0.0
        %529 = vmatpush1.msra.mxu0 0.0
        %530 = vmatprep.subr.mxu0 0.0
        %531 = vmatpush1.msra.mxu0 0.0
        %532 = vmatprep.subr.mxu0 0.0
        %533 = vmatpush1.msra.mxu0 0.0
        %534 = vmatprep.subr.mxu0 0.0
        %535 = vmatpush1.msra.mxu0 0.0
        %536 = vmatprep.subr.mxu0 0.0
        %537 = vmatpush1.msra.mxu0 0.0
        %538 = vmatprep.subr.mxu0 0.0
        %539 = vmatpush1.msra.mxu0 0.0
        %540 = vmatprep.subr.mxu0 0.0
        %541 = vmatpush1.msra.mxu0 0.0
        %542 = vmatprep.subr.mxu0 0.0
        %543 = vmatpush1.msra.mxu0 0.0
        %544 = vmatprep.subr.mxu0 0.0
        %545 = vmatpush1.msra.mxu0 0.0
        %546 = vmatprep.subr.mxu0 0.0
        %547 = vmatpush1.msra.mxu0 0.0
        %548 = vmatprep.subr.mxu0 0.0
        %549 = vmatpush1.msra.mxu0 0.0
        %550 = vmatprep.subr.mxu0 0.0
        %551 = vmatpush1.msra.mxu0 0.0
        %552 = vmatprep.subr.mxu0 0.0
        %553 = vmatpush1.msra.mxu0 0.0
        %554 = vmatprep.subr.mxu0 0.0
        %555 = vmatpush1.msra.mxu0 0.0
        %556 = vmatprep.subr.mxu0 0.0
        %557 = vmatpush1.msra.mxu0 0.0
        %558 = vmatprep.subr.mxu0 0.0
        %559 = vmatpush1.msra.mxu0 0.0
        %560 = vmatprep.subr.mxu0 0.0
        %561 = vmatpush1.msra.mxu0 0.0
        %562 = vmatprep.subr.mxu0 0.0
        %563 = vmatpush1.msra.mxu0 0.0
        %564 = vmatprep.subr.mxu0 0.0
        %565 = vmatpush1.msra.mxu0 0.0
        %566 = vmatprep.subr.mxu0 0.0
        %567 = vmatpush1.msra.mxu0 0.0
        %568 = vmatprep.subr.mxu0 0.0
        %569 = vmatpush1.msra.mxu0 0.0
        %570 = vmatprep.subr.mxu0 0.0
        %571 = vmatpush1.msra.mxu0 0.0
        %572 = vmatprep.subr.mxu0 0.0
        %573 = vmatpush1.msra.mxu0 0.0
        %574 = vmatprep.subr.mxu0 0.0
        %575 = vmatpush1.msra.mxu0 0.0
        %576 = vmatprep.mubr.f32.mxu0 0.0
        %577 = vmatmul.mubr.f32.gmra.mrb[0].mxu0 %v507
        %v578 = vpop.f32.mrb[0].mxu0
        %v579 = vadd.f32 0.0, %v578
        %v580 = vpop.f32.mrb[0].mxu0
        %581 = vmatprep.mubr.f32.mxu0 0.0
        %582 = vmatmul.mubr.f32.gmra.mrb[0].mxu0 %v510
        %v583 = vpop.f32.mrb[0].mxu0
        %v584 = vadd.f32 0.0, %v583
        %v585 = vpop.f32.mrb[0].mxu0
        %586 = vdwg.mxu0
        %v587 = vld [vmem:[%s6] sm:$0x1]
        %v589 = vlaneseq
        %v590 = vshrl.u32 %v589, 7
        %v591 = vsub.s32 0, %v590
        %v592 = vrot.slane %v587, %v591
        %vm594 = vcmask 64512
        %v596 = vsel %vm594, %v494, 0
        %v599 = vsel %vm594, %v499, 0
        %v602 = vsel %vm594, %v579, 0
        %v605 = vsel %vm594, %v584, 0
        %607 = vmatprep.subr.mxu0 0.0
        %608 = vmatpush1.xpose.msra.mxu0 %v602
        %609 = vmatprep.subr.mxu0 0.0
        %610 = vmatpush1.xpose.msra.mxu0 %v605
        %611 = vmatprep.subr.mxu0 0.0
        %612 = vmatpush1.xpose.msra.mxu0 0.0
        %613 = vmatprep.subr.mxu0 0.0
        %614 = vmatpush1.xpose.msra.mxu0 0.0
        %615 = vmatprep.subr.mxu0 0.0
        %616 = vmatpush1.xpose.msra.mxu0 0.0
        %617 = vmatprep.subr.mxu0 0.0
        %618 = vmatpush1.xpose.msra.mxu0 0.0
        %619 = vmatprep.subr.mxu0 0.0
        %620 = vmatpush1.xpose.msra.mxu0 0.0
        %621 = vmatprep.subr.mxu0 0.0
        %622 = vmatpush1.xpose.msra.mxu0 0.0
        %623 = vmatprep.subr.mxu0 0.0
        %624 = vmatpush1.xpose.msra.mxu0 0.0
        %625 = vmatprep.subr.mxu0 0.0
        %626 = vmatpush1.xpose.msra.mxu0 0.0
        %627 = vmatprep.subr.mxu0 0.0
        %628 = vmatpush1.xpose.msra.mxu0 0.0
        %629 = vmatprep.subr.mxu0 0.0
        %630 = vmatpush1.xpose.msra.mxu0 0.0
        %631 = vmatprep.subr.mxu0 0.0
        %632 = vmatpush1.xpose.msra.mxu0 0.0
        %633 = vmatprep.subr.mxu0 0.0
        %634 = vmatpush1.xpose.msra.mxu0 0.0
        %635 = vmatprep.subr.mxu0 0.0
        %636 = vmatpush1.xpose.msra.mxu0 0.0
        %637 = vmatprep.subr.mxu0 0.0
        %638 = vmatpush1.xpose.msra.mxu0 0.0
        %639 = vmatprep.subr.mxu0 0.0
        %640 = vmatpush1.xpose.msra.mxu0 0.0
        %641 = vmatprep.subr.mxu0 0.0
        %642 = vmatpush1.xpose.msra.mxu0 0.0
        %643 = vmatprep.subr.mxu0 0.0
        %644 = vmatpush1.xpose.msra.mxu0 0.0
        %645 = vmatprep.subr.mxu0 0.0
        %646 = vmatpush1.xpose.msra.mxu0 0.0
        %647 = vmatprep.subr.mxu0 0.0
        %648 = vmatpush1.xpose.msra.mxu0 0.0
        %649 = vmatprep.subr.mxu0 0.0
        %650 = vmatpush1.xpose.msra.mxu0 0.0
        %651 = vmatprep.subr.mxu0 0.0
        %652 = vmatpush1.xpose.msra.mxu0 0.0
        %653 = vmatprep.subr.mxu0 0.0
        %654 = vmatpush1.xpose.msra.mxu0 0.0
        %655 = vmatprep.subr.mxu0 0.0
        %656 = vmatpush1.xpose.msra.mxu0 0.0
        %657 = vmatprep.subr.mxu0 0.0
        %658 = vmatpush1.xpose.msra.mxu0 0.0
        %659 = vmatprep.subr.mxu0 0.0
        %660 = vmatpush1.xpose.msra.mxu0 0.0
        %661 = vmatprep.subr.mxu0 0.0
        %662 = vmatpush1.xpose.msra.mxu0 0.0
        %663 = vmatprep.subr.mxu0 0.0
        %664 = vmatpush1.xpose.msra.mxu0 0.0
        %665 = vmatprep.subr.mxu0 0.0
        %666 = vmatpush1.xpose.msra.mxu0 0.0
        %667 = vmatprep.subr.mxu0 0.0
        %668 = vmatpush1.xpose.msra.mxu0 0.0
        %669 = vmatprep.subr.mxu0 0.0
        %670 = vmatpush1.xpose.msra.mxu0 0.0
        %671 = vmatprep.mubr.f32.mxu0 0.0
        %672 = vmatmul.mubr.f32.gmra.mrb[0].mxu0 %v596
        %v673 = vpop.f32.mrb[0].mxu0
        %v674 = vadd.f32 0.0, %v673
        %v675 = vpop.f32.mrb[0].mxu0
        %676 = vmatprep.mubr.f32.mxu0 0.0
        %677 = vmatmul.mubr.f32.gmra.mrb[0].mxu0 %v599
        %v678 = vpop.f32.mrb[0].mxu0
        %v679 = vadd.f32 0.0, %v678
        %v680 = vpop.f32.mrb[0].mxu0
        %681 = vdwg.mxu0
        %vm682 = vcmask 130048
        %v683 = vsel %vm682, %v674, -inf
        %684 = vmax.xlane.f32.xlu0 %v683
        %v685 = vpop.xlane.xlu0 %684
        %v686 = vsel %vm682, %v679, -inf
        %687 = vmax.xlane.f32.xlu0 %v686
        %v688 = vpop.xlane.xlu0 %687
        %v689 = vsub.f32 %v674, %v685
        %v690 = vsub.f32 %v679, %v688
        %v691 = vmul.f32 %v689, 1.442695
        %v692 = vpow.pop %v691
        %v693 = vmul.f32 %v690, 1.442695
        %v694 = vpow.pop %v693
        %v695 = vsel %vm682, %v692, 0.0
        %696 = vadd.xlane.f32.xlu0 %v695
        %v697 = vpop.xlane.xlu0 %696
        %v698 = vsel %vm682, %v694, 0.0
        %699 = vadd.xlane.f32.xlu0 %v698
        %v700 = vpop.xlane.xlu0 %699
        %701 = vrot.lane.b32.xlu0 %v579, 96
        %v702 = vpop.permute.xlu0 %701
        %703 = vrot.lane.b32.xlu0 %v584, 96
        %v704 = vpop.permute.xlu0 %703
        %v708 = vsel %vm682, %v692, 0
        %v711 = vsel %vm682, %v694, 0
        %713 = vmatprep.subr.mxu0 0.0
        %714 = vmatpush1.msra.mxu0 %v702
        %715 = vmatprep.subr.mxu0 0.0
        %716 = vmatpush1.msra.mxu0 %v704
        %717 = vmatprep.subr.mxu0 0.0
        %718 = vmatpush1.msra.mxu0 0.0
        %719 = vmatprep.subr.mxu0 0.0
        %720 = vmatpush1.msra.mxu0 0.0
        %721 = vmatprep.subr.mxu0 0.0
        %722 = vmatpush1.msra.mxu0 0.0
        %723 = vmatprep.subr.mxu0 0.0
        %724 = vmatpush1.msra.mxu0 0.0
        %725 = vmatprep.subr.mxu0 0.0
        %726 = vmatpush1.msra.mxu0 0.0
        %727 = vmatprep.subr.mxu0 0.0
        %728 = vmatpush1.msra.mxu0 0.0
        %729 = vmatprep.subr.mxu0 0.0
        %730 = vmatpush1.msra.mxu0 0.0
        %731 = vmatprep.subr.mxu0 0.0
        %732 = vmatpush1.msra.mxu0 0.0
        %733 = vmatprep.subr.mxu0 0.0
        %734 = vmatpush1.msra.mxu0 0.0
        %735 = vmatprep.subr.mxu0 0.0
        %736 = vmatpush1.msra.mxu0 0.0
        %737 = vmatprep.subr.mxu0 0.0
        %738 = vmatpush1.msra.mxu0 0.0
        %739 = vmatprep.subr.mxu0 0.0
        %740 = vmatpush1.msra.mxu0 0.0
        %741 = vmatprep.subr.mxu0 0.0
        %742 = vmatpush1.msra.mxu0 0.0
        %743 = vmatprep.subr.mxu0 0.0
        %744 = vmatpush1.msra.mxu0 0.0
        %745 = vmatprep.subr.mxu0 0.0
        %746 = vmatpush1.msra.mxu0 0.0
        %747 = vmatprep.subr.mxu0 0.0
        %748 = vmatpush1.msra.mxu0 0.0
        %749 = vmatprep.subr.mxu0 0.0
        %750 = vmatpush1.msra.mxu0 0.0
        %751 = vmatprep.subr.mxu0 0.0
        %752 = vmatpush1.msra.mxu0 0.0
        %753 = vmatprep.subr.mxu0 0.0
        %754 = vmatpush1.msra.mxu0 0.0
        %755 = vmatprep.subr.mxu0 0.0
        %756 = vmatpush1.msra.mxu0 0.0
        %757 = vmatprep.subr.mxu0 0.0
        %758 = vmatpush1.msra.mxu0 0.0
        %759 = vmatprep.subr.mxu0 0.0
        %760 = vmatpush1.msra.mxu0 0.0
        %761 = vmatprep.subr.mxu0 0.0
        %762 = vmatpush1.msra.mxu0 0.0
        %763 = vmatprep.subr.mxu0 0.0
        %764 = vmatpush1.msra.mxu0 0.0
        %765 = vmatprep.subr.mxu0 0.0
        %766 = vmatpush1.msra.mxu0 0.0
        %767 = vmatprep.subr.mxu0 0.0
        %768 = vmatpush1.msra.mxu0 0.0
        %769 = vmatprep.subr.mxu0 0.0
        %770 = vmatpush1.msra.mxu0 0.0
        %771 = vmatprep.subr.mxu0 0.0
        %772 = vmatpush1.msra.mxu0 0.0
        %773 = vmatprep.subr.mxu0 0.0
        %774 = vmatpush1.msra.mxu0 0.0
        %775 = vmatprep.subr.mxu0 0.0
        %776 = vmatpush1.msra.mxu0 0.0
        %777 = vmatprep.mubr.f32.mxu0 0.0
        %778 = vmatmul.mubr.f32.gmra.mrb[0].mxu0 %v708
        %v779 = vpop.f32.mrb[0].mxu0
        %v780 = vadd.f32 0.0, %v779
        %v781 = vpop.f32.mrb[0].mxu0
        %782 = vmatprep.mubr.f32.mxu0 0.0
        %783 = vmatmul.mubr.f32.gmra.mrb[0].mxu0 %v711
        %v784 = vpop.f32.mrb[0].mxu0
        %v785 = vadd.f32 0.0, %v784
        %v786 = vpop.f32.mrb[0].mxu0
        %787 = vdwg.mxu0
        %v788 = vrcp.pop %v697
        %v789 = vrcp.pop %v700
        %v790 = vmul.f32 %v780, %v788
        %v791 = vmul.f32 %v785, %v789
        %v792 = vld [vmem:[#allocation11] sm:$0xff]
        %v794 = vsel %vm594, %v790, 0
        %v797 = vsel %vm594, %v791, 0
        %799 = vmatprep.subr.mxu0 0.0
        %800 = vmatpush1.msra.mxu0 %v792
        %801 = vmatprep.subr.mxu0 0.0
        %802 = vmatpush1.msra.mxu0 0.0
        %803 = vmatprep.subr.mxu0 0.0
        %804 = vmatpush1.msra.mxu0 0.0
        %805 = vmatprep.subr.mxu0 0.0
        %806 = vmatpush1.msra.mxu0 0.0
        %807 = vmatprep.subr.mxu0 0.0
        %808 = vmatpush1.msra.mxu0 0.0
        %809 = vmatprep.subr.mxu0 0.0
        %810 = vmatpush1.msra.mxu0 0.0
        %811 = vmatprep.subr.mxu0 0.0
        %812 = vmatpush1.msra.mxu0 0.0
        %813 = vmatprep.subr.mxu0 0.0
        %814 = vmatpush1.msra.mxu0 0.0
        %815 = vmatprep.subr.mxu0 0.0
        %816 = vmatpush1.msra.mxu0 0.0
        %817 = vmatprep.subr.mxu0 0.0
        %818 = vmatpush1.msra.mxu0 0.0
        %819 = vmatprep.subr.mxu0 0.0
        %820 = vmatpush1.msra.mxu0 0.0
        %821 = vmatprep.subr.mxu0 0.0
        %822 = vmatpush1.msra.mxu0 0.0
        %823 = vmatprep.subr.mxu0 0.0
        %824 = vmatpush1.msra.mxu0 0.0
        %825 = vmatprep.subr.mxu0 0.0
        %826 = vmatpush1.msra.mxu0 0.0
        %827 = vmatprep.subr.mxu0 0.0
        %828 = vmatpush1.msra.mxu0 0.0
        %829 = vmatprep.subr.mxu0 0.0
        %830 = vmatpush1.msra.mxu0 0.0
        %831 = vmatprep.subr.mxu0 0.0
        %832 = vmatpush1.msra.mxu0 0.0
        %833 = vmatprep.subr.mxu0 0.0
        %834 = vmatpush1.msra.mxu0 0.0
        %835 = vmatprep.subr.mxu0 0.0
        %836 = vmatpush1.msra.mxu0 0.0
        %837 = vmatprep.subr.mxu0 0.0
        %838 = vmatpush1.msra.mxu0 0.0
        %839 = vmatprep.subr.mxu0 0.0
        %840 = vmatpush1.msra.mxu0 0.0
        %841 = vmatprep.subr.mxu0 0.0
        %842 = vmatpush1.msra.mxu0 0.0
        %843 = vmatprep.subr.mxu0 0.0
        %844 = vmatpush1.msra.mxu0 0.0
        %845 = vmatprep.subr.mxu0 0.0
        %846 = vmatpush1.msra.mxu0 0.0
        %847 = vmatprep.subr.mxu0 0.0
        %848 = vmatpush1.msra.mxu0 0.0
        %849 = vmatprep.subr.mxu0 0.0
        %850 = vmatpush1.msra.mxu0 0.0
        %851 = vmatprep.subr.mxu0 0.0
        %852 = vmatpush1.msra.mxu0 0.0
        %853 = vmatprep.subr.mxu0 0.0
        %854 = vmatpush1.msra.mxu0 0.0
        %855 = vmatprep.subr.mxu0 0.0
        %856 = vmatpush1.msra.mxu0 0.0
        %857 = vmatprep.subr.mxu0 0.0
        %858 = vmatpush1.msra.mxu0 0.0
        %859 = vmatprep.subr.mxu0 0.0
        %860 = vmatpush1.msra.mxu0 0.0
        %861 = vmatprep.subr.mxu0 0.0
        %862 = vmatpush1.msra.mxu0 0.0
        %863 = vmatprep.mubr.f32.mxu0 0.0
        %864 = vmatmul.mubr.f32.gmra.mrb[0].mxu0 %v794
        %v865 = vpop.f32.mrb[0].mxu0
        %v866 = vadd.f32 0.0, %v865
        %v867 = vpop.f32.mrb[0].mxu0
        %868 = vmatprep.mubr.f32.mxu0 0.0
        %869 = vmatmul.mubr.f32.gmra.mrb[0].mxu0 %v797
        %v870 = vpop.f32.mrb[0].mxu0
        %v871 = vadd.f32 0.0, %v870
        %v872 = vpop.f32.mrb[0].mxu0
        %873 = vdwg.mxu0
        %v874 = vadd.f32 %v592, %v866
        %v875 = vadd.f32 %v592, %v871
        %876 = vrot.lane.b32.xlu0 %v494, 120
        %v877 = vpop.permute.xlu0 %876
        %878 = vrot.lane.b32.xlu0 %v499, 120
        %v879 = vpop.permute.xlu0 %878
        %880 = vrot.lane.b32.xlu0 %v579, 120
        %v881 = vpop.permute.xlu0 %880
        %882 = vrot.lane.b32.xlu0 %v584, 120
        %v883 = vpop.permute.xlu0 %882
        %v884 = vsel %vm594, %v877, 0
        %v886 = vsel %vm594, %v879, 0
        %v888 = vsel %vm594, %v881, 0
        %v890 = vsel %vm594, %v883, 0
        %892 = vmatprep.subr.mxu0 0.0
        %893 = vmatpush1.xpose.msra.mxu0 %v888
        %894 = vmatprep.subr.mxu0 0.0
        %895 = vmatpush1.xpose.msra.mxu0 %v890
        %896 = vmatprep.subr.mxu0 0.0
        %897 = vmatpush1.xpose.msra.mxu0 0.0
        %898 = vmatprep.subr.mxu0 0.0
        %899 = vmatpush1.xpose.msra.mxu0 0.0
        %900 = vmatprep.subr.mxu0 0.0
        %901 = vmatpush1.xpose.msra.mxu0 0.0
        %902 = vmatprep.subr.mxu0 0.0
        %903 = vmatpush1.xpose.msra.mxu0 0.0
        %904 = vmatprep.subr.mxu0 0.0
        %905 = vmatpush1.xpose.msra.mxu0 0.0
        %906 = vmatprep.subr.mxu0 0.0
        %907 = vmatpush1.xpose.msra.mxu0 0.0
        %908 = vmatprep.subr.mxu0 0.0
        %909 = vmatpush1.xpose.msra.mxu0 0.0
        %910 = vmatprep.subr.mxu0 0.0
        %911 = vmatpush1.xpose.msra.mxu0 0.0
        %912 = vmatprep.subr.mxu0 0.0
        %913 = vmatpush1.xpose.msra.mxu0 0.0
        %914 = vmatprep.subr.mxu0 0.0
        %915 = vmatpush1.xpose.msra.mxu0 0.0
        %916 = vmatprep.subr.mxu0 0.0
        %917 = vmatpush1.xpose.msra.mxu0 0.0
        %918 = vmatprep.subr.mxu0 0.0
        %919 = vmatpush1.xpose.msra.mxu0 0.0
        %920 = vmatprep.subr.mxu0 0.0
        %921 = vmatpush1.xpose.msra.mxu0 0.0
        %922 = vmatprep.subr.mxu0 0.0
        %923 = vmatpush1.xpose.msra.mxu0 0.0
        %924 = vmatprep.subr.mxu0 0.0
        %925 = vmatpush1.xpose.msra.mxu0 0.0
        %926 = vmatprep.subr.mxu0 0.0
        %927 = vmatpush1.xpose.msra.mxu0 0.0
        %928 = vmatprep.subr.mxu0 0.0
        %929 = vmatpush1.xpose.msra.mxu0 0.0
        %930 = vmatprep.subr.mxu0 0.0
        %931 = vmatpush1.xpose.msra.mxu0 0.0
        %932 = vmatprep.subr.mxu0 0.0
        %933 = vmatpush1.xpose.msra.mxu0 0.0
        %934 = vmatprep.subr.mxu0 0.0
        %935 = vmatpush1.xpose.msra.mxu0 0.0
        %936 = vmatprep.subr.mxu0 0.0
        %937 = vmatpush1.xpose.msra.mxu0 0.0
        %938 = vmatprep.subr.mxu0 0.0
        %939 = vmatpush1.xpose.msra.mxu0 0.0
        %940 = vmatprep.subr.mxu0 0.0
        %941 = vmatpush1.xpose.msra.mxu0 0.0
        %942 = vmatprep.subr.mxu0 0.0
        %943 = vmatpush1.xpose.msra.mxu0 0.0
        %944 = vmatprep.subr.mxu0 0.0
        %945 = vmatpush1.xpose.msra.mxu0 0.0
        %946 = vmatprep.subr.mxu0 0.0
        %947 = vmatpush1.xpose.msra.mxu0 0.0
        %948 = vmatprep.subr.mxu0 0.0
        %949 = vmatpush1.xpose.msra.mxu0 0.0
        %950 = vmatprep.subr.mxu0 0.0
        %951 = vmatpush1.xpose.msra.mxu0 0.0
        %952 = vmatprep.subr.mxu0 0.0
        %953 = vmatpush1.xpose.msra.mxu0 0.0
        %954 = vmatprep.subr.mxu0 0.0
        %955 = vmatpush1.xpose.msra.mxu0 0.0
        %956 = vmatprep.mubr.f32.mxu0 0.0
        %957 = vmatmul.mubr.f32.gmra.mrb[0].mxu0 %v884
        %v958 = vpop.f32.mrb[0].mxu0
        %v959 = vadd.f32 0.0, %v958
        %v960 = vpop.f32.mrb[0].mxu0
        %961 = vmatprep.mubr.f32.mxu0 0.0
        %962 = vmatmul.mubr.f32.gmra.mrb[0].mxu0 %v886
        %v963 = vpop.f32.mrb[0].mxu0
        %v964 = vadd.f32 0.0, %v963
        %v965 = vpop.f32.mrb[0].mxu0
        %966 = vdwg.mxu0
        %v967 = vsel %vm682, %v959, -inf
        %968 = vmax.xlane.f32.xlu0 %v967
        %v969 = vpop.xlane.xlu0 %968
        %v970 = vsel %vm682, %v964, -inf
        %971 = vmax.xlane.f32.xlu0 %v970
        %v972 = vpop.xlane.xlu0 %971
        %v973 = vsub.f32 %v959, %v969
        %v974 = vsub.f32 %v964, %v972
        %v975 = vmul.f32 %v973, 1.442695
        %v976 = vpow.pop %v975
        %v977 = vmul.f32 %v974, 1.442695
        %v978 = vpow.pop %v977
        %v979 = vsel %vm682, %v976, 0.0
        %980 = vadd.xlane.f32.xlu0 %v979
        %v981 = vpop.xlane.xlu0 %980
        %v982 = vsel %vm682, %v978, 0.0
        %983 = vadd.xlane.f32.xlu0 %v982
        %v984 = vpop.xlane.xlu0 %983
        %985 = vrot.lane.b32.xlu0 %v579, 88
        %v986 = vpop.permute.xlu0 %985
        %987 = vrot.lane.b32.xlu0 %v584, 88
        %v988 = vpop.permute.xlu0 %987
        %v992 = vsel %vm682, %v976, 0
        %v995 = vsel %vm682, %v978, 0
        %997 = vmatprep.subr.mxu0 0.0
        %998 = vmatpush1.msra.mxu0 %v986
        %999 = vmatprep.subr.mxu0 0.0
        %1000 = vmatpush1.msra.mxu0 %v988
        %1001 = vmatprep.subr.mxu0 0.0
        %1002 = vmatpush1.msra.mxu0 0.0
        %1003 = vmatprep.subr.mxu0 0.0
        %1004 = vmatpush1.msra.mxu0 0.0
        %1005 = vmatprep.subr.mxu0 0.0
        %1006 = vmatpush1.msra.mxu0 0.0
        %1007 = vmatprep.subr.mxu0 0.0
        %1008 = vmatpush1.msra.mxu0 0.0
        %1009 = vmatprep.subr.mxu0 0.0
        %1010 = vmatpush1.msra.mxu0 0.0
        %1011 = vmatprep.subr.mxu0 0.0
        %1012 = vmatpush1.msra.mxu0 0.0
        %1013 = vmatprep.subr.mxu0 0.0
        %1014 = vmatpush1.msra.mxu0 0.0
        %1015 = vmatprep.subr.mxu0 0.0
        %1016 = vmatpush1.msra.mxu0 0.0
        %1017 = vmatprep.subr.mxu0 0.0
        %1018 = vmatpush1.msra.mxu0 0.0
        %1019 = vmatprep.subr.mxu0 0.0
        %1020 = vmatpush1.msra.mxu0 0.0
        %1021 = vmatprep.subr.mxu0 0.0
        %1022 = vmatpush1.msra.mxu0 0.0
        %1023 = vmatprep.subr.mxu0 0.0
        %1024 = vmatpush1.msra.mxu0 0.0
        %1025 = vmatprep.subr.mxu0 0.0
        %1026 = vmatpush1.msra.mxu0 0.0
        %1027 = vmatprep.subr.mxu0 0.0
        %1028 = vmatpush1.msra.mxu0 0.0
        %1029 = vmatprep.subr.mxu0 0.0
        %1030 = vmatpush1.msra.mxu0 0.0
        %1031 = vmatprep.subr.mxu0 0.0
        %1032 = vmatpush1.msra.mxu0 0.0
        %1033 = vmatprep.subr.mxu0 0.0
        %1034 = vmatpush1.msra.mxu0 0.0
        %1035 = vmatprep.subr.mxu0 0.0
        %1036 = vmatpush1.msra.mxu0 0.0
        %1037 = vmatprep.subr.mxu0 0.0
        %1038 = vmatpush1.msra.mxu0 0.0
        %1039 = vmatprep.subr.mxu0 0.0
        %1040 = vmatpush1.msra.mxu0 0.0
        %1041 = vmatprep.subr.mxu0 0.0
        %1042 = vmatpush1.msra.mxu0 0.0
        %1043 = vmatprep.subr.mxu0 0.0
        %1044 = vmatpush1.msra.mxu0 0.0
        %1045 = vmatprep.subr.mxu0 0.0
        %1046 = vmatpush1.msra.mxu0 0.0
        %1047 = vmatprep.subr.mxu0 0.0
        %1048 = vmatpush1.msra.mxu0 0.0
        %1049 = vmatprep.subr.mxu0 0.0
        %1050 = vmatpush1.msra.mxu0 0.0
        %1051 = vmatprep.subr.mxu0 0.0
        %1052 = vmatpush1.msra.mxu0 0.0
        %1053 = vmatprep.subr.mxu0 0.0
        %1054 = vmatpush1.msra.mxu0 0.0
        %1055 = vmatprep.subr.mxu0 0.0
        %1056 = vmatpush1.msra.mxu0 0.0
        %1057 = vmatprep.subr.mxu0 0.0
        %1058 = vmatpush1.msra.mxu0 0.0
        %1059 = vmatprep.subr.mxu0 0.0
        %1060 = vmatpush1.msra.mxu0 0.0
        %1061 = vmatprep.mubr.f32.mxu0 0.0
        %1062 = vmatmul.mubr.f32.gmra.mrb[0].mxu0 %v992
        %v1063 = vpop.f32.mrb[0].mxu0
        %v1064 = vadd.f32 0.0, %v1063
        %v1065 = vpop.f32.mrb[0].mxu0
        %1066 = vmatprep.mubr.f32.mxu0 0.0
        %1067 = vmatmul.mubr.f32.gmra.mrb[0].mxu0 %v995
        %v1068 = vpop.f32.mrb[0].mxu0
        %v1069 = vadd.f32 0.0, %v1068
        %v1070 = vpop.f32.mrb[0].mxu0
        %1071 = vdwg.mxu0
        %v1072 = vrcp.pop %v981
        %v1073 = vrcp.pop %v984
        %v1074 = vmul.f32 %v1064, %v1072
        %v1075 = vmul.f32 %v1069, %v1073
        %v1076 = vld [vmem:[#allocation11 + $0x8] sm:$0xff]
        %v1078 = vsel %vm594, %v1074, 0
        %v1081 = vsel %vm594, %v1075, 0
        %1083 = vmatprep.subr.mxu0 0.0
        %1084 = vmatpush1.msra.mxu0 %v1076
        %1085 = vmatprep.subr.mxu0 0.0
        %1086 = vmatpush1.msra.mxu0 0.0
        %1087 = vmatprep.subr.mxu0 0.0
        %1088 = vmatpush1.msra.mxu0 0.0
        %1089 = vmatprep.subr.mxu0 0.0
        %1090 = vmatpush1.msra.mxu0 0.0
        %1091 = vmatprep.subr.mxu0 0.0
        %1092 = vmatpush1.msra.mxu0 0.0
        %1093 = vmatprep.subr.mxu0 0.0
        %1094 = vmatpush1.msra.mxu0 0.0
        %1095 = vmatprep.subr.mxu0 0.0
        %1096 = vmatpush1.msra.mxu0 0.0
        %1097 = vmatprep.subr.mxu0 0.0
        %1098 = vmatpush1.msra.mxu0 0.0
        %1099 = vmatprep.subr.mxu0 0.0
        %1100 = vmatpush1.msra.mxu0 0.0
        %1101 = vmatprep.subr.mxu0 0.0
        %1102 = vmatpush1.msra.mxu0 0.0
        %1103 = vmatprep.subr.mxu0 0.0
        %1104 = vmatpush1.msra.mxu0 0.0
        %1105 = vmatprep.subr.mxu0 0.0
        %1106 = vmatpush1.msra.mxu0 0.0
        %1107 = vmatprep.subr.mxu0 0.0
        %1108 = vmatpush1.msra.mxu0 0.0
        %1109 = vmatprep.subr.mxu0 0.0
        %1110 = vmatpush1.msra.mxu0 0.0
        %1111 = vmatprep.subr.mxu0 0.0
        %1112 = vmatpush1.msra.mxu0 0.0
        %1113 = vmatprep.subr.mxu0 0.0
        %1114 = vmatpush1.msra.mxu0 0.0
        %1115 = vmatprep.subr.mxu0 0.0
        %1116 = vmatpush1.msra.mxu0 0.0
        %1117 = vmatprep.subr.mxu0 0.0
        %1118 = vmatpush1.msra.mxu0 0.0
        %1119 = vmatprep.subr.mxu0 0.0
        %1120 = vmatpush1.msra.mxu0 0.0
        %1121 = vmatprep.subr.mxu0 0.0
        %1122 = vmatpush1.msra.mxu0 0.0
        %1123 = vmatprep.subr.mxu0 0.0
        %1124 = vmatpush1.msra.mxu0 0.0
        %1125 = vmatprep.subr.mxu0 0.0
        %1126 = vmatpush1.msra.mxu0 0.0
        %1127 = vmatprep.subr.mxu0 0.0
        %1128 = vmatpush1.msra.mxu0 0.0
        %1129 = vmatprep.subr.mxu0 0.0
        %1130 = vmatpush1.msra.mxu0 0.0
        %1131 = vmatprep.subr.mxu0 0.0
        %1132 = vmatpush1.msra.mxu0 0.0
        %1133 = vmatprep.subr.mxu0 0.0
        %1134 = vmatpush1.msra.mxu0 0.0
        %1135 = vmatprep.subr.mxu0 0.0
        %1136 = vmatpush1.msra.mxu0 0.0
        %1137 = vmatprep.subr.mxu0 0.0
        %1138 = vmatpush1.msra.mxu0 0.0
        %1139 = vmatprep.subr.mxu0 0.0
        %1140 = vmatpush1.msra.mxu0 0.0
        %1141 = vmatprep.subr.mxu0 0.0
        %1142 = vmatpush1.msra.mxu0 0.0
        %1143 = vmatprep.subr.mxu0 0.0
        %1144 = vmatpush1.msra.mxu0 0.0
        %1145 = vmatprep.subr.mxu0 0.0
        %1146 = vmatpush1.msra.mxu0 0.0
        %1147 = vmatprep.mubr.f32.mxu0 0.0
        %1148 = vmatmul.mubr.f32.gmra.mrb[0].mxu0 %v1078
        %v1149 = vpop.f32.mrb[0].mxu0
        %v1150 = vadd.f32 0.0, %v1149
        %v1151 = vpop.f32.mrb[0].mxu0
        %1152 = vmatprep.mubr.f32.mxu0 0.0
        %1153 = vmatmul.mubr.f32.gmra.mrb[0].mxu0 %v1081
        %v1154 = vpop.f32.mrb[0].mxu0
        %v1155 = vadd.f32 0.0, %v1154
        %v1156 = vpop.f32.mrb[0].mxu0
        %1157 = vdwg.mxu0
        %v1158 = vadd.f32 %v874, %v1150
        %v1159 = vadd.f32 %v875, %v1155
        %1160 = vrot.lane.b32.xlu0 %v494, 112
        %v1161 = vpop.permute.xlu0 %1160
        %1162 = vrot.lane.b32.xlu0 %v499, 112
        %v1163 = vpop.permute.xlu0 %1162
        %1164 = vrot.lane.b32.xlu0 %v579, 112
        %v1165 = vpop.permute.xlu0 %1164
        %1166 = vrot.lane.b32.xlu0 %v584, 112
        %v1167 = vpop.permute.xlu0 %1166
        %v1168 = vsel %vm594, %v1161, 0
        %v1170 = vsel %vm594, %v1163, 0
        %v1172 = vsel %vm594, %v1165, 0
        %v1174 = vsel %vm594, %v1167, 0
        %1176 = vmatprep.subr.mxu0 0.0
        %1177 = vmatpush1.xpose.msra.mxu0 %v1172
        %1178 = vmatprep.subr.mxu0 0.0
        %1179 = vmatpush1.xpose.msra.mxu0 %v1174
        %1180 = vmatprep.subr.mxu0 0.0
        %1181 = vmatpush1.xpose.msra.mxu0 0.0
        %1182 = vmatprep.subr.mxu0 0.0
        %1183 = vmatpush1.xpose.msra.mxu0 0.0
        %1184 = vmatprep.subr.mxu0 0.0
        %1185 = vmatpush1.xpose.msra.mxu0 0.0
        %1186 = vmatprep.subr.mxu0 0.0
        %1187 = vmatpush1.xpose.msra.mxu0 0.0
        %1188 = vmatprep.subr.mxu0 0.0
        %1189 = vmatpush1.xpose.msra.mxu0 0.0
        %1190 = vmatprep.subr.mxu0 0.0
        %1191 = vmatpush1.xpose.msra.mxu0 0.0
        %1192 = vmatprep.subr.mxu0 0.0
        %1193 = vmatpush1.xpose.msra.mxu0 0.0
        %1194 = vmatprep.subr.mxu0 0.0
        %1195 = vmatpush1.xpose.msra.mxu0 0.0
        %1196 = vmatprep.subr.mxu0 0.0
        %1197 = vmatpush1.xpose.msra.mxu0 0.0
        %1198 = vmatprep.subr.mxu0 0.0
        %1199 = vmatpush1.xpose.msra.mxu0 0.0
        %1200 = vmatprep.subr.mxu0 0.0
        %1201 = vmatpush1.xpose.msra.mxu0 0.0
        %1202 = vmatprep.subr.mxu0 0.0
        %1203 = vmatpush1.xpose.msra.mxu0 0.0
        %1204 = vmatprep.subr.mxu0 0.0
        %1205 = vmatpush1.xpose.msra.mxu0 0.0
        %1206 = vmatprep.subr.mxu0 0.0
        %1207 = vmatpush1.xpose.msra.mxu0 0.0
        %1208 = vmatprep.subr.mxu0 0.0
        %1209 = vmatpush1.xpose.msra.mxu0 0.0
        %1210 = vmatprep.subr.mxu0 0.0
        %1211 = vmatpush1.xpose.msra.mxu0 0.0
        %1212 = vmatprep.subr.mxu0 0.0
        %1213 = vmatpush1.xpose.msra.mxu0 0.0
        %1214 = vmatprep.subr.mxu0 0.0
        %1215 = vmatpush1.xpose.msra.mxu0 0.0
        %1216 = vmatprep.subr.mxu0 0.0
        %1217 = vmatpush1.xpose.msra.mxu0 0.0
        %1218 = vmatprep.subr.mxu0 0.0
        %1219 = vmatpush1.xpose.msra.mxu0 0.0
        %1220 = vmatprep.subr.mxu0 0.0
        %1221 = vmatpush1.xpose.msra.mxu0 0.0
        %1222 = vmatprep.subr.mxu0 0.0
        %1223 = vmatpush1.xpose.msra.mxu0 0.0
        %1224 = vmatprep.subr.mxu0 0.0
        %1225 = vmatpush1.xpose.msra.mxu0 0.0
        %1226 = vmatprep.subr.mxu0 0.0
        %1227 = vmatpush1.xpose.msra.mxu0 0.0
        %1228 = vmatprep.subr.mxu0 0.0
        %1229 = vmatpush1.xpose.msra.mxu0 0.0
        %1230 = vmatprep.subr.mxu0 0.0
        %1231 = vmatpush1.xpose.msra.mxu0 0.0
        %1232 = vmatprep.subr.mxu0 0.0
        %1233 = vmatpush1.xpose.msra.mxu0 0.0
        %1234 = vmatprep.subr.mxu0 0.0
        %1235 = vmatpush1.xpose.msra.mxu0 0.0
        %1236 = vmatprep.subr.mxu0 0.0
        %1237 = vmatpush1.xpose.msra.mxu0 0.0
        %1238 = vmatprep.subr.mxu0 0.0
        %1239 = vmatpush1.xpose.msra.mxu0 0.0
        %1240 = vmatprep.mubr.f32.mxu0 0.0
        %1241 = vmatmul.mubr.f32.gmra.mrb[0].mxu0 %v1168
        %v1242 = vpop.f32.mrb[0].mxu0
        %v1243 = vadd.f32 0.0, %v1242
        %v1244 = vpop.f32.mrb[0].mxu0
        %1245 = vmatprep.mubr.f32.mxu0 0.0
        %1246 = vmatmul.mubr.f32.gmra.mrb[0].mxu0 %v1170
        %v1247 = vpop.f32.mrb[0].mxu0
        %v1248 = vadd.f32 0.0, %v1247
        %v1249 = vpop.f32.mrb[0].mxu0
        %1250 = vdwg.mxu0
        %v1251 = vsel %vm682, %v1243, -inf
        %1252 = vmax.xlane.f32.xlu0 %v1251
        %v1253 = vpop.xlane.xlu0 %1252
        %v1254 = vsel %vm682, %v1248, -inf
        %1255 = vmax.xlane.f32.xlu0 %v1254
        %v1256 = vpop.xlane.xlu0 %1255
        %v1257 = vsub.f32 %v1243, %v1253
        %v1258 = vsub.f32 %v1248, %v1256
        %v1259 = vmul.f32 %v1257, 1.442695
        %v1260 = vpow.pop %v1259
        %v1261 = vmul.f32 %v1258, 1.442695
        %v1262 = vpow.pop %v1261
        %v1263 = vsel %vm682, %v1260, 0.0
        %1264 = vadd.xlane.f32.xlu0 %v1263
        %v1265 = vpop.xlane.xlu0 %1264
        %v1266 = vsel %vm682, %v1262, 0.0
        %1267 = vadd.xlane.f32.xlu0 %v1266
        %v1268 = vpop.xlane.xlu0 %1267
        %1269 = vrot.lane.b32.xlu0 %v579, 80
        %v1270 = vpop.permute.xlu0 %1269
        %1271 = vrot.lane.b32.xlu0 %v584, 80
        %v1272 = vpop.permute.xlu0 %1271
        %v1276 = vsel %vm682, %v1260, 0
        %v1279 = vsel %vm682, %v1262, 0
        %1281 = vmatprep.subr.mxu0 0.0
        %1282 = vmatpush1.msra.mxu0 %v1270
        %1283 = vmatprep.subr.mxu0 0.0
        %1284 = vmatpush1.msra.mxu0 %v1272
        %1285 = vmatprep.subr.mxu0 0.0
        %1286 = vmatpush1.msra.mxu0 0.0
        %1287 = vmatprep.subr.mxu0 0.0
        %1288 = vmatpush1.msra.mxu0 0.0
        %1289 = vmatprep.subr.mxu0 0.0
        %1290 = vmatpush1.msra.mxu0 0.0
        %1291 = vmatprep.subr.mxu0 0.0
        %1292 = vmatpush1.msra.mxu0 0.0
        %1293 = vmatprep.subr.mxu0 0.0
        %1294 = vmatpush1.msra.mxu0 0.0
        %1295 = vmatprep.subr.mxu0 0.0
        %1296 = vmatpush1.msra.mxu0 0.0
        %1297 = vmatprep.subr.mxu0 0.0
        %1298 = vmatpush1.msra.mxu0 0.0
        %1299 = vmatprep.subr.mxu0 0.0
        %1300 = vmatpush1.msra.mxu0 0.0
        %1301 = vmatprep.subr.mxu0 0.0
        %1302 = vmatpush1.msra.mxu0 0.0
        %1303 = vmatprep.subr.mxu0 0.0
        %1304 = vmatpush1.msra.mxu0 0.0
        %1305 = vmatprep.subr.mxu0 0.0
        %1306 = vmatpush1.msra.mxu0 0.0
        %1307 = vmatprep.subr.mxu0 0.0
        %1308 = vmatpush1.msra.mxu0 0.0
        %1309 = vmatprep.subr.mxu0 0.0
        %1310 = vmatpush1.msra.mxu0 0.0
        %1311 = vmatprep.subr.mxu0 0.0
        %1312 = vmatpush1.msra.mxu0 0.0
        %1313 = vmatprep.subr.mxu0 0.0
        %1314 = vmatpush1.msra.mxu0 0.0
        %1315 = vmatprep.subr.mxu0 0.0
        %1316 = vmatpush1.msra.mxu0 0.0
        %1317 = vmatprep.subr.mxu0 0.0
        %1318 = vmatpush1.msra.mxu0 0.0
        %1319 = vmatprep.subr.mxu0 0.0
        %1320 = vmatpush1.msra.mxu0 0.0
        %1321 = vmatprep.subr.mxu0 0.0
        %1322 = vmatpush1.msra.mxu0 0.0
        %1323 = vmatprep.subr.mxu0 0.0
        %1324 = vmatpush1.msra.mxu0 0.0
        %1325 = vmatprep.subr.mxu0 0.0
        %1326 = vmatpush1.msra.mxu0 0.0
        %1327 = vmatprep.subr.mxu0 0.0
        %1328 = vmatpush1.msra.mxu0 0.0
        %1329 = vmatprep.subr.mxu0 0.0
        %1330 = vmatpush1.msra.mxu0 0.0
        %1331 = vmatprep.subr.mxu0 0.0
        %1332 = vmatpush1.msra.mxu0 0.0
        %1333 = vmatprep.subr.mxu0 0.0
        %1334 = vmatpush1.msra.mxu0 0.0
        %1335 = vmatprep.subr.mxu0 0.0
        %1336 = vmatpush1.msra.mxu0 0.0
        %1337 = vmatprep.subr.mxu0 0.0
        %1338 = vmatpush1.msra.mxu0 0.0
        %1339 = vmatprep.subr.mxu0 0.0
        %1340 = vmatpush1.msra.mxu0 0.0
        %1341 = vmatprep.subr.mxu0 0.0
        %1342 = vmatpush1.msra.mxu0 0.0
        %1343 = vmatprep.subr.mxu0 0.0
        %1344 = vmatpush1.msra.mxu0 0.0
        %1345 = vmatprep.mubr.f32.mxu0 0.0
        %1346 = vmatmul.mubr.f32.gmra.mrb[0].mxu0 %v1276
        %v1347 = vpop.f32.mrb[0].mxu0
        %v1348 = vadd.f32 0.0, %v1347
        %v1349 = vpop.f32.mrb[0].mxu0
        %1350 = vmatprep.mubr.f32.mxu0 0.0
        %1351 = vmatmul.mubr.f32.gmra.mrb[0].mxu0 %v1279
        %v1352 = vpop.f32.mrb[0].mxu0
        %v1353 = vadd.f32 0.0, %v1352
        %v1354 = vpop.f32.mrb[0].mxu0
        %1355 = vdwg.mxu0
        %v1356 = vrcp.pop %v1265
        %v1357 = vrcp.pop %v1268
        %v1358 = vmul.f32 %v1348, %v1356
        %v1359 = vmul.f32 %v1353, %v1357
        %v1360 = vld [vmem:[#allocation11 + $0x10] sm:$0xff]
        %v1362 = vsel %vm594, %v1358, 0
        %v1365 = vsel %vm594, %v1359, 0
        %1367 = vmatprep.subr.mxu0 0.0
        %1368 = vmatpush1.msra.mxu0 %v1360
        %1369 = vmatprep.subr.mxu0 0.0
        %1370 = vmatpush1.msra.mxu0 0.0
        %1371 = vmatprep.subr.mxu0 0.0
        %1372 = vmatpush1.msra.mxu0 0.0
        %1373 = vmatprep.subr.mxu0 0.0
        %1374 = vmatpush1.msra.mxu0 0.0
        %1375 = vmatprep.subr.mxu0 0.0
        %1376 = vmatpush1.msra.mxu0 0.0
        %1377 = vmatprep.subr.mxu0 0.0
        %1378 = vmatpush1.msra.mxu0 0.0
        %1379 = vmatprep.subr.mxu0 0.0
        %1380 = vmatpush1.msra.mxu0 0.0
        %1381 = vmatprep.subr.mxu0 0.0
        %1382 = vmatpush1.msra.mxu0 0.0
        %1383 = vmatprep.subr.mxu0 0.0
        %1384 = vmatpush1.msra.mxu0 0.0
        %1385 = vmatprep.subr.mxu0 0.0
        %1386 = vmatpush1.msra.mxu0 0.0
        %1387 = vmatprep.subr.mxu0 0.0
        %1388 = vmatpush1.msra.mxu0 0.0
        %1389 = vmatprep.subr.mxu0 0.0
        %1390 = vmatpush1.msra.mxu0 0.0
        %1391 = vmatprep.subr.mxu0 0.0
        %1392 = vmatpush1.msra.mxu0 0.0
        %1393 = vmatprep.subr.mxu0 0.0
        %1394 = vmatpush1.msra.mxu0 0.0
        %1395 = vmatprep.subr.mxu0 0.0
        %1396 = vmatpush1.msra.mxu0 0.0
        %1397 = vmatprep.subr.mxu0 0.0
        %1398 = vmatpush1.msra.mxu0 0.0
        %1399 = vmatprep.subr.mxu0 0.0
        %1400 = vmatpush1.msra.mxu0 0.0
        %1401 = vmatprep.subr.mxu0 0.0
        %1402 = vmatpush1.msra.mxu0 0.0
        %1403 = vmatprep.subr.mxu0 0.0
        %1404 = vmatpush1.msra.mxu0 0.0
        %1405 = vmatprep.subr.mxu0 0.0
        %1406 = vmatpush1.msra.mxu0 0.0
        %1407 = vmatprep.subr.mxu0 0.0
        %1408 = vmatpush1.msra.mxu0 0.0
        %1409 = vmatprep.subr.mxu0 0.0
        %1410 = vmatpush1.msra.mxu0 0.0
        %1411 = vmatprep.subr.mxu0 0.0
        %1412 = vmatpush1.msra.mxu0 0.0
        %1413 = vmatprep.subr.mxu0 0.0
        %1414 = vmatpush1.msra.mxu0 0.0
        %1415 = vmatprep.subr.mxu0 0.0
        %1416 = vmatpush1.msra.mxu0 0.0
        %1417 = vmatprep.subr.mxu0 0.0
        %1418 = vmatpush1.msra.mxu0 0.0
        %1419 = vmatprep.subr.mxu0 0.0
        %1420 = vmatpush1.msra.mxu0 0.0
        %1421 = vmatprep.subr.mxu0 0.0
        %1422 = vmatpush1.msra.mxu0 0.0
        %1423 = vmatprep.subr.mxu0 0.0
        %1424 = vmatpush1.msra.mxu0 0.0
        %1425 = vmatprep.subr.mxu0 0.0
        %1426 = vmatpush1.msra.mxu0 0.0
        %1427 = vmatprep.subr.mxu0 0.0
        %1428 = vmatpush1.msra.mxu0 0.0
        %1429 = vmatprep.subr.mxu0 0.0
        %1430 = vmatpush1.msra.mxu0 0.0
        %1431 = vmatprep.mubr.f32.mxu0 0.0
        %1432 = vmatmul.mubr.f32.gmra.mrb[0].mxu0 %v1362
        %v1433 = vpop.f32.mrb[0].mxu0
        %v1434 = vadd.f32 0.0, %v1433
        %v1435 = vpop.f32.mrb[0].mxu0
        %1436 = vmatprep.mubr.f32.mxu0 0.0
        %1437 = vmatmul.mubr.f32.gmra.mrb[0].mxu0 %v1365
        %v1438 = vpop.f32.mrb[0].mxu0
        %v1439 = vadd.f32 0.0, %v1438
        %v1440 = vpop.f32.mrb[0].mxu0
        %1441 = vdwg.mxu0
        %v1442 = vadd.f32 %v1158, %v1434
        %v1443 = vadd.f32 %v1159, %v1439
        %1444 = vrot.lane.b32.xlu0 %v494, 104
        %v1445 = vpop.permute.xlu0 %1444
        %1446 = vrot.lane.b32.xlu0 %v499, 104
        %v1447 = vpop.permute.xlu0 %1446
        %1448 = vrot.lane.b32.xlu0 %v579, 104
        %v1449 = vpop.permute.xlu0 %1448
        %1450 = vrot.lane.b32.xlu0 %v584, 104
        %v1451 = vpop.permute.xlu0 %1450
        %v1452 = vsel %vm594, %v1445, 0
        %v1454 = vsel %vm594, %v1447, 0
        %v1456 = vsel %vm594, %v1449, 0
        %v1458 = vsel %vm594, %v1451, 0
        %1460 = vmatprep.subr.mxu0 0.0
        %1461 = vmatpush1.xpose.msra.mxu0 %v1456
        %1462 = vmatprep.subr.mxu0 0.0
        %1463 = vmatpush1.xpose.msra.mxu0 %v1458
        %1464 = vmatprep.subr.mxu0 0.0
        %1465 = vmatpush1.xpose.msra.mxu0 0.0
        %1466 = vmatprep.subr.mxu0 0.0
        %1467 = vmatpush1.xpose.msra.mxu0 0.0
        %1468 = vmatprep.subr.mxu0 0.0
        %1469 = vmatpush1.xpose.msra.mxu0 0.0
        %1470 = vmatprep.subr.mxu0 0.0
        %1471 = vmatpush1.xpose.msra.mxu0 0.0
        %1472 = vmatprep.subr.mxu0 0.0
        %1473 = vmatpush1.xpose.msra.mxu0 0.0
        %1474 = vmatprep.subr.mxu0 0.0
        %1475 = vmatpush1.xpose.msra.mxu0 0.0
        %1476 = vmatprep.subr.mxu0 0.0
        %1477 = vmatpush1.xpose.msra.mxu0 0.0
        %1478 = vmatprep.subr.mxu0 0.0
        %1479 = vmatpush1.xpose.msra.mxu0 0.0
        %1480 = vmatprep.subr.mxu0 0.0
        %1481 = vmatpush1.xpose.msra.mxu0 0.0
        %1482 = vmatprep.subr.mxu0 0.0
        %1483 = vmatpush1.xpose.msra.mxu0 0.0
        %1484 = vmatprep.subr.mxu0 0.0
        %1485 = vmatpush1.xpose.msra.mxu0 0.0
        %1486 = vmatprep.subr.mxu0 0.0
        %1487 = vmatpush1.xpose.msra.mxu0 0.0
        %1488 = vmatprep.subr.mxu0 0.0
        %1489 = vmatpush1.xpose.msra.mxu0 0.0
        %1490 = vmatprep.subr.mxu0 0.0
        %1491 = vmatpush1.xpose.msra.mxu0 0.0
        %1492 = vmatprep.subr.mxu0 0.0
        %1493 = vmatpush1.xpose.msra.mxu0 0.0
        %1494 = vmatprep.subr.mxu0 0.0
        %1495 = vmatpush1.xpose.msra.mxu0 0.0
        %1496 = vmatprep.subr.mxu0 0.0
        %1497 = vmatpush1.xpose.msra.mxu0 0.0
        %1498 = vmatprep.subr.mxu0 0.0
        %1499 = vmatpush1.xpose.msra.mxu0 0.0
        %1500 = vmatprep.subr.mxu0 0.0
        %1501 = vmatpush1.xpose.msra.mxu0 0.0
        %1502 = vmatprep.subr.mxu0 0.0
        %1503 = vmatpush1.xpose.msra.mxu0 0.0
        %1504 = vmatprep.subr.mxu0 0.0
        %1505 = vmatpush1.xpose.msra.mxu0 0.0
        %1506 = vmatprep.subr.mxu0 0.0
        %1507 = vmatpush1.xpose.msra.mxu0 0.0
        %1508 = vmatprep.subr.mxu0 0.0
        %1509 = vmatpush1.xpose.msra.mxu0 0.0
        %1510 = vmatprep.subr.mxu0 0.0
        %1511 = vmatpush1.xpose.msra.mxu0 0.0
        %1512 = vmatprep.subr.mxu0 0.0
        %1513 = vmatpush1.xpose.msra.mxu0 0.0
        %1514 = vmatprep.subr.mxu0 0.0
        %1515 = vmatpush1.xpose.msra.mxu0 0.0
        %1516 = vmatprep.subr.mxu0 0.0
        %1517 = vmatpush1.xpose.msra.mxu0 0.0
        %1518 = vmatprep.subr.mxu0 0.0
        %1519 = vmatpush1.xpose.msra.mxu0 0.0
        %1520 = vmatprep.subr.mxu0 0.0
        %1521 = vmatpush1.xpose.msra.mxu0 0.0
        %1522 = vmatprep.subr.mxu0 0.0
        %1523 = vmatpush1.xpose.msra.mxu0 0.0
        %1524 = vmatprep.mubr.f32.mxu0 0.0
        %1525 = vmatmul.mubr.f32.gmra.mrb[0].mxu0 %v1452
        %v1526 = vpop.f32.mrb[0].mxu0
        %v1527 = vadd.f32 0.0, %v1526
        %v1528 = vpop.f32.mrb[0].mxu0
        %1529 = vmatprep.mubr.f32.mxu0 0.0
        %1530 = vmatmul.mubr.f32.gmra.mrb[0].mxu0 %v1454
        %v1531 = vpop.f32.mrb[0].mxu0
        %v1532 = vadd.f32 0.0, %v1531
        %v1533 = vpop.f32.mrb[0].mxu0
        %1534 = vdwg.mxu0
        %v1535 = vsel %vm682, %v1527, -inf
        %1536 = vmax.xlane.f32.xlu0 %v1535
        %v1537 = vpop.xlane.xlu0 %1536
        %v1538 = vsel %vm682, %v1532, -inf
        %1539 = vmax.xlane.f32.xlu0 %v1538
        %v1540 = vpop.xlane.xlu0 %1539
        %v1541 = vsub.f32 %v1527, %v1537
        %v1542 = vsub.f32 %v1532, %v1540
        %v1543 = vmul.f32 %v1541, 1.442695
        %v1544 = vpow.pop %v1543
        %v1545 = vmul.f32 %v1542, 1.442695
        %v1546 = vpow.pop %v1545
        %v1547 = vsel %vm682, %v1544, 0.0
        %1548 = vadd.xlane.f32.xlu0 %v1547
        %v1549 = vpop.xlane.xlu0 %1548
        %v1550 = vsel %vm682, %v1546, 0.0
        %1551 = vadd.xlane.f32.xlu0 %v1550
        %v1552 = vpop.xlane.xlu0 %1551
        %1553 = vrot.lane.b32.xlu0 %v579, 72
        %v1554 = vpop.permute.xlu0 %1553
        %1555 = vrot.lane.b32.xlu0 %v584, 72
        %v1556 = vpop.permute.xlu0 %1555
        %v1560 = vsel %vm682, %v1544, 0
        %v1563 = vsel %vm682, %v1546, 0
        %1565 = vmatprep.subr.mxu0 0.0
        %1566 = vmatpush1.msra.mxu0 %v1554
        %1567 = vmatprep.subr.mxu0 0.0
        %1568 = vmatpush1.msra.mxu0 %v1556
        %1569 = vmatprep.subr.mxu0 0.0
        %1570 = vmatpush1.msra.mxu0 0.0
        %1571 = vmatprep.subr.mxu0 0.0
        %1572 = vmatpush1.msra.mxu0 0.0
        %1573 = vmatprep.subr.mxu0 0.0
        %1574 = vmatpush1.msra.mxu0 0.0
        %1575 = vmatprep.subr.mxu0 0.0
        %1576 = vmatpush1.msra.mxu0 0.0
        %1577 = vmatprep.subr.mxu0 0.0
        %1578 = vmatpush1.msra.mxu0 0.0
        %1579 = vmatprep.subr.mxu0 0.0
        %1580 = vmatpush1.msra.mxu0 0.0
        %1581 = vmatprep.subr.mxu0 0.0
        %1582 = vmatpush1.msra.mxu0 0.0
        %1583 = vmatprep.subr.mxu0 0.0
        %1584 = vmatpush1.msra.mxu0 0.0
        %1585 = vmatprep.subr.mxu0 0.0
        %1586 = vmatpush1.msra.mxu0 0.0
        %1587 = vmatprep.subr.mxu0 0.0
        %1588 = vmatpush1.msra.mxu0 0.0
        %1589 = vmatprep.subr.mxu0 0.0
        %1590 = vmatpush1.msra.mxu0 0.0
        %1591 = vmatprep.subr.mxu0 0.0
        %1592 = vmatpush1.msra.mxu0 0.0
        %1593 = vmatprep.subr.mxu0 0.0
        %1594 = vmatpush1.msra.mxu0 0.0
        %1595 = vmatprep.subr.mxu0 0.0
        %1596 = vmatpush1.msra.mxu0 0.0
        %1597 = vmatprep.subr.mxu0 0.0
        %1598 = vmatpush1.msra.mxu0 0.0
        %1599 = vmatprep.subr.mxu0 0.0
        %1600 = vmatpush1.msra.mxu0 0.0
        %1601 = vmatprep.subr.mxu0 0.0
        %1602 = vmatpush1.msra.mxu0 0.0
        %1603 = vmatprep.subr.mxu0 0.0
        %1604 = vmatpush1.msra.mxu0 0.0
        %1605 = vmatprep.subr.mxu0 0.0
        %1606 = vmatpush1.msra.mxu0 0.0
        %1607 = vmatprep.subr.mxu0 0.0
        %1608 = vmatpush1.msra.mxu0 0.0
        %1609 = vmatprep.subr.mxu0 0.0
        %1610 = vmatpush1.msra.mxu0 0.0
        %1611 = vmatprep.subr.mxu0 0.0
        %1612 = vmatpush1.msra.mxu0 0.0
        %1613 = vmatprep.subr.mxu0 0.0
        %1614 = vmatpush1.msra.mxu0 0.0
        %1615 = vmatprep.subr.mxu0 0.0
        %1616 = vmatpush1.msra.mxu0 0.0
        %1617 = vmatprep.subr.mxu0 0.0
        %1618 = vmatpush1.msra.mxu0 0.0
        %1619 = vmatprep.subr.mxu0 0.0
        %1620 = vmatpush1.msra.mxu0 0.0
        %1621 = vmatprep.subr.mxu0 0.0
        %1622 = vmatpush1.msra.mxu0 0.0
        %1623 = vmatprep.subr.mxu0 0.0
        %1624 = vmatpush1.msra.mxu0 0.0
        %1625 = vmatprep.subr.mxu0 0.0
        %1626 = vmatpush1.msra.mxu0 0.0
        %1627 = vmatprep.subr.mxu0 0.0
        %1628 = vmatpush1.msra.mxu0 0.0
        %1629 = vmatprep.mubr.f32.mxu0 0.0
        %1630 = vmatmul.mubr.f32.gmra.mrb[0].mxu0 %v1560
        %v1631 = vpop.f32.mrb[0].mxu0
        %v1632 = vadd.f32 0.0, %v1631
        %v1633 = vpop.f32.mrb[0].mxu0
        %1634 = vmatprep.mubr.f32.mxu0 0.0
        %1635 = vmatmul.mubr.f32.gmra.mrb[0].mxu0 %v1563
        %v1636 = vpop.f32.mrb[0].mxu0
        %v1637 = vadd.f32 0.0, %v1636
        %v1638 = vpop.f32.mrb[0].mxu0
        %1639 = vdwg.mxu0
        %v1640 = vrcp.pop %v1549
        %v1641 = vrcp.pop %v1552
        %v1642 = vmul.f32 %v1632, %v1640
        %v1643 = vmul.f32 %v1637, %v1641
        %v1644 = vld [vmem:[#allocation11 + $0x18] sm:$0xff]
        %v1646 = vsel %vm594, %v1642, 0
        %v1649 = vsel %vm594, %v1643, 0
        %1651 = vmatprep.subr.mxu0 0.0
        %1652 = vmatpush1.msra.mxu0 %v1644
        %1653 = vmatprep.subr.mxu0 0.0
        %1654 = vmatpush1.msra.mxu0 0.0
        %1655 = vmatprep.subr.mxu0 0.0
        %1656 = vmatpush1.msra.mxu0 0.0
        %1657 = vmatprep.subr.mxu0 0.0
        %1658 = vmatpush1.msra.mxu0 0.0
        %1659 = vmatprep.subr.mxu0 0.0
        %1660 = vmatpush1.msra.mxu0 0.0
        %1661 = vmatprep.subr.mxu0 0.0
        %1662 = vmatpush1.msra.mxu0 0.0
        %1663 = vmatprep.subr.mxu0 0.0
        %1664 = vmatpush1.msra.mxu0 0.0
        %1665 = vmatprep.subr.mxu0 0.0
        %1666 = vmatpush1.msra.mxu0 0.0
        %1667 = vmatprep.subr.mxu0 0.0
        %1668 = vmatpush1.msra.mxu0 0.0
        %1669 = vmatprep.subr.mxu0 0.0
        %1670 = vmatpush1.msra.mxu0 0.0
        %1671 = vmatprep.subr.mxu0 0.0
        %1672 = vmatpush1.msra.mxu0 0.0
        %1673 = vmatprep.subr.mxu0 0.0
        %1674 = vmatpush1.msra.mxu0 0.0
        %1675 = vmatprep.subr.mxu0 0.0
        %1676 = vmatpush1.msra.mxu0 0.0
        %1677 = vmatprep.subr.mxu0 0.0
        %1678 = vmatpush1.msra.mxu0 0.0
        %1679 = vmatprep.subr.mxu0 0.0
        %1680 = vmatpush1.msra.mxu0 0.0
        %1681 = vmatprep.subr.mxu0 0.0
        %1682 = vmatpush1.msra.mxu0 0.0
        %1683 = vmatprep.subr.mxu0 0.0
        %1684 = vmatpush1.msra.mxu0 0.0
        %1685 = vmatprep.subr.mxu0 0.0
        %1686 = vmatpush1.msra.mxu0 0.0
        %1687 = vmatprep.subr.mxu0 0.0
        %1688 = vmatpush1.msra.mxu0 0.0
        %1689 = vmatprep.subr.mxu0 0.0
        %1690 = vmatpush1.msra.mxu0 0.0
        %1691 = vmatprep.subr.mxu0 0.0
        %1692 = vmatpush1.msra.mxu0 0.0
        %1693 = vmatprep.subr.mxu0 0.0
        %1694 = vmatpush1.msra.mxu0 0.0
        %1695 = vmatprep.subr.mxu0 0.0
        %1696 = vmatpush1.msra.mxu0 0.0
        %1697 = vmatprep.subr.mxu0 0.0
        %1698 = vmatpush1.msra.mxu0 0.0
        %1699 = vmatprep.subr.mxu0 0.0
        %1700 = vmatpush1.msra.mxu0 0.0
        %1701 = vmatprep.subr.mxu0 0.0
        %1702 = vmatpush1.msra.mxu0 0.0
        %1703 = vmatprep.subr.mxu0 0.0
        %1704 = vmatpush1.msra.mxu0 0.0
        %1705 = vmatprep.subr.mxu0 0.0
        %1706 = vmatpush1.msra.mxu0 0.0
        %1707 = vmatprep.subr.mxu0 0.0
        %1708 = vmatpush1.msra.mxu0 0.0
        %1709 = vmatprep.subr.mxu0 0.0
        %1710 = vmatpush1.msra.mxu0 0.0
        %1711 = vmatprep.subr.mxu0 0.0
        %1712 = vmatpush1.msra.mxu0 0.0
        %1713 = vmatprep.subr.mxu0 0.0
        %1714 = vmatpush1.msra.mxu0 0.0
        %1715 = vmatprep.mubr.f32.mxu0 0.0
        %1716 = vmatmul.mubr.f32.gmra.mrb[0].mxu0 %v1646
        %v1717 = vpop.f32.mrb[0].mxu0
        %v1718 = vadd.f32 0.0, %v1717
        %v1719 = vpop.f32.mrb[0].mxu0
        %1720 = vmatprep.mubr.f32.mxu0 0.0
        %1721 = vmatmul.mubr.f32.gmra.mrb[0].mxu0 %v1649
        %v1722 = vpop.f32.mrb[0].mxu0
        %v1723 = vadd.f32 0.0, %v1722
        %v1724 = vpop.f32.mrb[0].mxu0
        %1725 = vdwg.mxu0
        %v1726 = vadd.f32 %v1442, %v1718
        %v1727 = vadd.f32 %v1443, %v1723
        %1728 = vst.msk [vmem:[%s411] sm:$0xff] %vm420, %v1726
        %1729 = vst.msk [vmem:[%s411 + $0x8] sm:$0xff] %vm420, %v1727
        %s1730 = sand.u32 %s199, 1
        %s1731 = scalar_lea.sflag [#allocation4], %s1730
        %s1732 = sand.u32 %s199, 1
        %s1733 = smul.addr %s1732, 16
        %s1734 = scalar_lea.vmem [#allocation13], %s1733
        // Predicated region
        $region73: #{tpu_custom_call.1} parent=47 // pred_check
          %p1735 = pneg %p209
        $region74: #{tpu_custom_call.1} parent=47 // pred_check_branch
          %1737 = sbr.rel (%p1735) target = $region76
        $region75: #{tpu_custom_call.1} parent=47 // pred_region
          %s1739 = ssub.s32 256, 256
          %1740 = vsyncadd %s1731, %s1739
          %s1741 = smul.addr %s29, 2
          %s1742 = smul.addr %s1741, 128
          %s1743 = scalar_lea.hbm %s7, %s1742
          %s1744 = sshll.u32 %s1734, 4
          %s1745 = int_to_ptr.vmem [resolvable:$true] %s1744
          %1750 = dma.vmem_to_hbm [thread:$0]  %s1745, 256, %s1743, %s1731, 128, 128, 8
        $region76: #{tpu_custom_call.1} parent=47 // pred_fallthru
          _
      $region48: #{tpu_custom_call.1} parent=5 // pred_fallthru
        _
      %p1751 = scmp.le.s32.totalorder 2, %s24
      // Predicated region
      $region77: #{tpu_custom_call.1} parent=5 // pred_check
        %p1752 = pneg %p1751
      $region78: #{tpu_custom_call.1} parent=5 // pred_check_branch
        %1754 = sbr.rel (%p1752) target = $region80
      $region79: #{tpu_custom_call.1} parent=5 // pred_region
        %s1755 = ssub.s32 %s24, 2
        // Predicated region
        $region81: #{tpu_custom_call.1} parent=79 // pred_check
          %p1756 = pneg %p215
        $region82: #{tpu_custom_call.1} parent=79 // pred_check_branch
          %1758 = sbr.rel (%p1756) target = $region84
        $region83: #{tpu_custom_call.1} parent=79 // pred_region
          %s1759 = sand.u32 %s200, 1
          %s1760 = scalar_lea.sflag [#allocation4], %s1759
          %s1761 = sand.u32 %s200, 1
          %s1762 = smul.addr %s1761, 16
          %s1763 = scalar_lea.vmem [#allocation13], %s1762
          %1764 = dma.done %s1760, 256
        $region84: #{tpu_custom_call.1} parent=79 // pred_fallthru
          _
      $region80: #{tpu_custom_call.1} parent=5 // pred_fallthru
        _
    $region6: #{tpu_custom_call.1} parent=1 // loop_footer
      %s28 = sadd.s32 1, %s24
    $region7: #{tpu_custom_call.1} parent=1 // loop_footer_branch
      %23 = sbr.rel target = $region3
    $region8: #{tpu_custom_call.1} parent=1 // loop_exit
      _
    %1765 = vsyncpa [#allocation3], 1
    %s1766 = scalar_lea.sflag [#allocation3], 1
    %1767 = vsyncpa %s1766, 1
    %1768 = vsyncpa [#allocation6], 1
    %s1769 = scalar_lea.sflag [#allocation6], 1
    %1770 = vsyncpa %s1769, 1
    %1771 = vsyncpa [#allocation9], 1
    %1772 = vsyncpa [#allocation12], 1
    %1773 = vsyncpa [#allocation4], 1
    %s1774 = scalar_lea.sflag [#allocation4], 1
    %1775 = vsyncpa %s1774, 1

</llo_original>
